<compile_context>
chip_gen: v6e
topology: v6e:2x2x1
jax: 0.10.0
libtpu: 0.0.40
codegen_flags: <defaults>
</compile_context>

<pallas_src>
import jax
import jax.numpy as jnp
from jax import lax
from jax.experimental import pallas as pl
from jax.experimental.pallas import tpu as pltpu

# ---------------- model sizes (small, consistent with the module) ----------------
CORPUS = 50
EMBED = 16      # embedd_dim
HIDDEN = 32     # hidden_dim
OUTPUT = 5      # output_size
BATCH = 2       # batch_size (number of sentences)
SEQ = 8         # tokens per sentence

H4 = 4 * HIDDEN            # 128 -> fused gate width == full vreg lane width
OUT_ROWS = BATCH * BATCH + 2 * BATCH   # 8
OUT_COLS = 128                          # lane-dense output slab (one vreg)


def sentiment_lstm_kernel(ids_ref, table_ref, gates_ref, head_ref, state_ref, out_ref):
    B, T, E, Hd = BATCH, SEQ, EMBED, HIDDEN
    BB = B * B

    # ---- embedding gather in-kernel via one-hot matmul (exact, MXU-friendly) -----------
    ids = ids_ref[...]                                            # (B*T, 1) int32
    iota = lax.broadcasted_iota(jnp.int32, (B * T, CORPUS), 1)
    onehot = (iota == ids).astype(jnp.float32)                    # (B*T, CORPUS)
    emb = jnp.dot(onehot, table_ref[...],
                  preferred_element_type=jnp.float32)             # (B*T, E)

    # ---- fused gate slab: rows [0:E]=Wx_fused, [E:E+H]=Wh_fused, [E+H]=bias; cols = 4H --
    gates = gates_ref[...]
    wx = gates[0:E, :]                                            # (E, 4H)
    wh = gates[E:E + Hd, :]                                       # (H, 4H)
    b = gates[E + Hd:E + Hd + 1, :]                               # (1, 4H)

    # ---- head slab: cols [0:H] = [W_hq; b_q], cols [H:H+OUT] = [W_fc; b_fc] -------------
    head = head_ref[...]
    whq = head[0:Hd, 0:Hd]
    bq = head[Hd:Hd + 1, 0:Hd]
    wfc = head[0:Hd, Hd:Hd + OUTPUT]
    bfc = head[Hd:Hd + 1, Hd:Hd + OUTPUT]

    # ---- hoist every input projection out of the serial recurrence (one MXU call) -------
    xproj = jnp.dot(emb, wx, preferred_element_type=jnp.float32) + b   # (B*T, 4H)

    state = state_ref[...]                                        # (2B, H) = [h0; c0]
    H = state[0:B, :]
    C = state[B:2 * B, :]

    ys = []
    # fully-unrolled static loops: one fused 128-lane matmul + 1 sigmoid slab + 2 tanh / step
    for s in range(B):
        for t in range(T):
            r = s * T + t
            # (1,4H) precomputed input row broadcast against (B,4H) recurrent projection
            g = xproj[r:r + 1, :] + jnp.dot(H, wh, preferred_element_type=jnp.float32)
            sig = jax.nn.sigmoid(g[:, 0:3 * Hd])                  # one EUP push for I/F/O
            I = sig[:, 0:Hd]
            Fg = sig[:, Hd:2 * Hd]
            O = sig[:, 2 * Hd:3 * Hd]
            Ct = jnp.tanh(g[:, 3 * Hd:4 * Hd])
            C = Fg * C + I * Ct
            H = O * jnp.tanh(C)
        # Y only matters after the last timestep of this sentence.
        ys.append(jnp.dot(H, whq, preferred_element_type=jnp.float32) + bq)   # (B, H)

    res_flat = jnp.concatenate(ys, axis=0)                        # (B*B, H)
    # fc head on the flattened lstm output (dropout is identity in eval mode).
    fc = jnp.dot(res_flat, wfc, preferred_element_type=jnp.float32) + bfc     # (B*B, OUT)

    # ---- single lane-dense (8,128) store:
    #   cols [0:H]      : rows 0:BB = res_flat, rows BB:BB+B = final H, rows BB+B:BB+2B = final C
    #   cols [H:H+OUT]  : rows 0:BB = fc
    left = jnp.concatenate([res_flat, H, C], axis=0)                              # (8, H)
    right = jnp.concatenate(
        [fc, jnp.zeros((BB, OUT_COLS - Hd - OUTPUT), jnp.float32)], axis=1)       # (BB, 128-H)
    right = jnp.concatenate(
        [right, jnp.zeros((2 * B, OUT_COLS - Hd), jnp.float32)], axis=0)          # (8, 128-H)
    out_ref[...] = jnp.concatenate([left, right], axis=1)                         # (8, 128)


# ---------------------------------------------------------------------------------------
def init_params(key):
    ks = jax.random.split(key, 16)
    n = lambda k, shape: (0.01 * jax.random.normal(k, shape)).astype(jnp.float32)
    p = {
        "embedding": jax.random.normal(ks[0], (CORPUS, EMBED)).astype(jnp.float32),
        "wxi": n(ks[1], (EMBED, HIDDEN)), "whi": n(ks[2], (HIDDEN, HIDDEN)),
        "bi": jnp.zeros((1, HIDDEN), jnp.float32),
        "wxf": n(ks[3], (EMBED, HIDDEN)), "whf": n(ks[4], (HIDDEN, HIDDEN)),
        "bf": jnp.zeros((1, HIDDEN), jnp.float32),
        "wxo": n(ks[5], (EMBED, HIDDEN)), "who": n(ks[6], (HIDDEN, HIDDEN)),
        "bo": jnp.zeros((1, HIDDEN), jnp.float32),
        "wxc": n(ks[7], (EMBED, HIDDEN)), "whc": n(ks[8], (HIDDEN, HIDDEN)),
        "bc": jnp.zeros((1, HIDDEN), jnp.float32),
        "whq": n(ks[9], (HIDDEN, HIDDEN)),
        "bq": jnp.zeros((1, HIDDEN), jnp.float32),
        # fc: nn.Linear(hidden, output); stored pre-transposed as (hidden, output).
        "wfc": n(ks[10], (HIDDEN, OUTPUT)),
        "bfc": jnp.zeros((1, OUTPUT), jnp.float32),
    }
    return p


def pack_params(p):
    """Host-side fusion of the LSTM / head weights into two lane-dense slabs."""
    wx_f = jnp.concatenate([p["wxi"], p["wxf"], p["wxo"], p["wxc"]], axis=1)  # (E, 4H)
    wh_f = jnp.concatenate([p["whi"], p["whf"], p["who"], p["whc"]], axis=1)  # (H, 4H)
    b_f = jnp.concatenate([p["bi"], p["bf"], p["bo"], p["bc"]], axis=1)       # (1, 4H)
    gates = jnp.concatenate([wx_f, wh_f, b_f], axis=0)                        # (E+H+1, 4H)
    head_l = jnp.concatenate([p["whq"], p["bq"]], axis=0)                     # (H+1, H)
    head_r = jnp.concatenate([p["wfc"], p["bfc"]], axis=0)                    # (H+1, OUT)
    head = jnp.concatenate([head_l, head_r], axis=1)                          # (H+1, H+OUT)
    return {"table": p["embedding"], "gates": gates, "head": head}


@jax.jit
def sentiment_rnn_forward(token_ids, h0, c0, packed):
    B, T = token_ids.shape
    ids = token_ids.reshape(B * T, 1).astype(jnp.int32)           # row order matches xproj
    state0 = jnp.concatenate([h0, c0], axis=0)                    # (2B, H)

    vmem = pl.BlockSpec(memory_space=pltpu.MemorySpace.VMEM)
    slab = pl.pallas_call(
        sentiment_lstm_kernel,
        out_shape=jax.ShapeDtypeStruct((OUT_ROWS, OUT_COLS), jnp.float32),
        in_specs=[vmem] * 5,
        out_specs=vmem,
    )(ids, packed["table"], packed["gates"], packed["head"], state0)

    BB = B * B
    res = slab[0:BB, 0:HIDDEN].reshape(B, B, HIDDEN)              # stacked lstm outputs
    hout = slab[BB:BB + B, 0:HIDDEN]                              # final H
    cout = slab[BB + B:BB + 2 * B, 0:HIDDEN]                      # final C
    fc_out = slab[0:BB, HIDDEN:HIDDEN + OUTPUT]                   # fc output

    # Glue: view(batch, -1)[:, -5:]
    out = fc_out.reshape(B, -1)[:, -OUTPUT:]
    return out, (hout, cout), res


def reference_forward(token_ids, h0, c0, p):
    """Pure-JAX replica of the PyTorch forward (eval-mode dropout)."""
    B, T = token_ids.shape
    embeds = jnp.take(p["embedding"], token_ids, axis=0)
    H, C = h0, c0
    outs = []
    for s in range(B):
        for t in range(T):
            X = embeds[s, t][None, :]
            I = jax.nn.sigmoid(X @ p["wxi"] + H @ p["whi"] + p["bi"])
            Fg = jax.nn.sigmoid(X @ p["wxf"] + H @ p["whf"] + p["bf"])
            O = jax.nn.sigmoid(X @ p["wxo"] + H @ p["who"] + p["bo"])
            Ct = jnp.tanh(X @ p["wxc"] + H @ p["whc"] + p["bc"])
            C = Fg * C + I * Ct
            H = O * jnp.tanh(C)
        outs.append(H @ p["whq"] + p["bq"])
    res = jnp.stack(outs, axis=0)                                 # (B, B, Hd)
    flat = res.reshape(-1, HIDDEN)
    fc = flat @ p["wfc"] + p["bfc"]
    out = fc.reshape(B, -1)[:, -OUTPUT:]
    return out, (H, C), res


if __name__ == "__main__":
    key = jax.random.PRNGKey(0)
    pkey, xkey = jax.random.split(key)
    params = init_params(pkey)
    packed = pack_params(params)

    token_ids = jax.random.randint(xkey, (BATCH, SEQ), 0, CORPUS, dtype=jnp.int32)
    h0 = jnp.zeros((BATCH, HIDDEN), jnp.float32)   # init_hidden
    c0 = jnp.zeros((BATCH, HIDDEN), jnp.float32)

    out, (h_new, c_new), res = sentiment_rnn_forward(token_ids, h0, c0, packed)
    out = jax.block_until_ready(out)

    ref_out, (ref_h, ref_c), ref_res = reference_forward(token_ids, h0, c0, params)
    assert out.shape == (BATCH, OUTPUT)
    assert jnp.allclose(out, ref_out, atol=1e-5, rtol=1e-5)
    assert jnp.allclose(h_new, ref_h, atol=1e-5, rtol=1e-5)
    assert jnp.allclose(c_new, ref_c, atol=1e-5, rtol=1e-5)
    assert jnp.allclose(res, ref_res, atol=1e-5, rtol=1e-5)

    print("KERNEL_OK")
</pallas_src>

<mosaic_0001>
module attributes {stable_mosaic.version = 11 : i64} {
  func.func @sentiment_lstm_kernel(%arg0: memref<16x1xi32, #tpu.memory_space<vmem>>, %arg1: memref<50x16xf32, #tpu.memory_space<vmem>>, %arg2: memref<49x128xf32, #tpu.memory_space<vmem>>, %arg3: memref<33x37xf32, #tpu.memory_space<vmem>>, %arg4: memref<4x32xf32, #tpu.memory_space<vmem>>, %arg5: memref<8x128xf32, #tpu.memory_space<vmem>>) attributes {dimension_semantics = [], scalar_prefetch = 0 : i64, scratch_operands = 0 : i64, tpu.core_type = #tpu.core_type<tc>} {
    %c0 = arith.constant 0 : index
    %c0_0 = arith.constant 0 : index
    %0 = vector.load %arg0[%c0, %c0_0] : memref<16x1xi32, #tpu.memory_space<vmem>>, vector<16x1xi32>
    %1 = tpu.iota {dimensions = array<i32: 1>} : vector<16x50xi32>
    %2 = vector.broadcast %0 : vector<16x1xi32> to vector<16x50xi32>
    %3 = arith.cmpi eq, %1, %2 : vector<16x50xi32>
    %4 = arith.extui %3 : vector<16x50xi1> to vector<16x50xi32>
    %5 = arith.sitofp %4 : vector<16x50xi32> to vector<16x50xf32>
    %c0_1 = arith.constant 0 : index
    %c0_2 = arith.constant 0 : index
    %6 = vector.load %arg1[%c0_1, %c0_2] : memref<50x16xf32, #tpu.memory_space<vmem>>, vector<50x16xf32>
    %cst = arith.constant dense<0.000000e+00> : vector<16x16xf32>
    %7 = tpu.matmul %5, %6, %cst {dimension_numbers = #tpu.dot_dimension_numbers<[1], [0], [0], [1], [0, 0, 1, 1], [], []>} : vector<16x50xf32>, vector<50x16xf32>, vector<16x16xf32> -> vector<16x16xf32>
    %c0_3 = arith.constant 0 : index
    %c0_4 = arith.constant 0 : index
    %8 = vector.load %arg2[%c0_3, %c0_4] : memref<49x128xf32, #tpu.memory_space<vmem>>, vector<49x128xf32>
    %9 = vector.extract_strided_slice %8 {offsets = [0, 0], sizes = [16, 128], strides = [1, 1]} : vector<49x128xf32> to vector<16x128xf32>
    %10 = vector.extract_strided_slice %8 {offsets = [16, 0], sizes = [32, 128], strides = [1, 1]} : vector<49x128xf32> to vector<32x128xf32>
    %11 = vector.extract_strided_slice %8 {offsets = [48, 0], sizes = [1, 128], strides = [1, 1]} : vector<49x128xf32> to vector<1x128xf32>
    %c0_5 = arith.constant 0 : index
    %c0_6 = arith.constant 0 : index
    %12 = vector.load %arg3[%c0_5, %c0_6] : memref<33x37xf32, #tpu.memory_space<vmem>>, vector<33x37xf32>
    %13 = vector.extract_strided_slice %12 {offsets = [0, 0], sizes = [32, 32], strides = [1, 1]} : vector<33x37xf32> to vector<32x32xf32>
    %14 = vector.extract_strided_slice %12 {offsets = [32, 0], sizes = [1, 32], strides = [1, 1]} : vector<33x37xf32> to vector<1x32xf32>
    %15 = vector.extract_strided_slice %12 {offsets = [0, 32], sizes = [32, 5], strides = [1, 1]} : vector<33x37xf32> to vector<32x5xf32>
    %16 = vector.extract_strided_slice %12 {offsets = [32, 32], sizes = [1, 5], strides = [1, 1]} : vector<33x37xf32> to vector<1x5xf32>
    %cst_7 = arith.constant dense<0.000000e+00> : vector<16x128xf32>
    %17 = tpu.matmul %7, %9, %cst_7 {dimension_numbers = #tpu.dot_dimension_numbers<[1], [0], [0], [1], [0, 0, 1, 1], [], []>} : vector<16x16xf32>, vector<16x128xf32>, vector<16x128xf32> -> vector<16x128xf32>
    %18 = vector.broadcast %11 : vector<1x128xf32> to vector<16x128xf32>
    %19 = arith.addf %17, %18 : vector<16x128xf32>
    %c0_8 = arith.constant 0 : index
    %c0_9 = arith.constant 0 : index
    %20 = vector.load %arg4[%c0_8, %c0_9] : memref<4x32xf32, #tpu.memory_space<vmem>>, vector<4x32xf32>
    %21 = vector.extract_strided_slice %20 {offsets = [0, 0], sizes = [2, 32], strides = [1, 1]} : vector<4x32xf32> to vector<2x32xf32>
    %22 = vector.extract_strided_slice %20 {offsets = [2, 0], sizes = [2, 32], strides = [1, 1]} : vector<4x32xf32> to vector<2x32xf32>
    %23 = vector.extract_strided_slice %19 {offsets = [0, 0], sizes = [1, 128], strides = [1, 1]} : vector<16x128xf32> to vector<1x128xf32>
    %cst_10 = arith.constant dense<0.000000e+00> : vector<2x128xf32>
    %24 = tpu.matmul %21, %10, %cst_10 {dimension_numbers = #tpu.dot_dimension_numbers<[1], [0], [0], [1], [0, 0, 1, 1], [], []>} : vector<2x32xf32>, vector<32x128xf32>, vector<2x128xf32> -> vector<2x128xf32>
    %25 = vector.broadcast %23 : vector<1x128xf32> to vector<2x128xf32>
    %26 = arith.addf %25, %24 : vector<2x128xf32>
    %27 = vector.extract_strided_slice %26 {offsets = [0, 0], sizes = [2, 96], strides = [1, 1]} : vector<2x128xf32> to vector<2x96xf32>
    %28 = arith.negf %27 : vector<2x96xf32>
    %29 = math.exp %28 : vector<2x96xf32>
    %cst_11 = arith.constant 1.000000e+00 : f32
    %30 = vector.broadcast %cst_11 : f32 to vector<2x96xf32>
    %31 = arith.addf %30, %29 : vector<2x96xf32>
    %32 = arith.divf %30, %31 : vector<2x96xf32>
    %33 = vector.extract_strided_slice %32 {offsets = [0, 0], sizes = [2, 32], strides = [1, 1]} : vector<2x96xf32> to vector<2x32xf32>
    %34 = vector.extract_strided_slice %32 {offsets = [0, 32], sizes = [2, 32], strides = [1, 1]} : vector<2x96xf32> to vector<2x32xf32>
    %35 = vector.extract_strided_slice %32 {offsets = [0, 64], sizes = [2, 32], strides = [1, 1]} : vector<2x96xf32> to vector<2x32xf32>
    %36 = vector.extract_strided_slice %26 {offsets = [0, 96], sizes = [2, 32], strides = [1, 1]} : vector<2x128xf32> to vector<2x32xf32>
    %37 = math.tanh %36 : vector<2x32xf32>
    %38 = arith.mulf %34, %22 : vector<2x32xf32>
    %39 = arith.mulf %33, %37 : vector<2x32xf32>
    %40 = arith.addf %38, %39 : vector<2x32xf32>
    %41 = math.tanh %40 : vector<2x32xf32>
    %42 = arith.mulf %35, %41 : vector<2x32xf32>
    %43 = vector.extract_strided_slice %19 {offsets = [1, 0], sizes = [1, 128], strides = [1, 1]} : vector<16x128xf32> to vector<1x128xf32>
    %cst_12 = arith.constant dense<0.000000e+00> : vector<2x128xf32>
    %44 = tpu.matmul %42, %10, %cst_12 {dimension_numbers = #tpu.dot_dimension_numbers<[1], [0], [0], [1], [0, 0, 1, 1], [], []>} : vector<2x32xf32>, vector<32x128xf32>, vector<2x128xf32> -> vector<2x128xf32>
    %45 = vector.broadcast %43 : vector<1x128xf32> to vector<2x128xf32>
    %46 = arith.addf %45, %44 : vector<2x128xf32>
    %47 = vector.extract_strided_slice %46 {offsets = [0, 0], sizes = [2, 96], strides = [1, 1]} : vector<2x128xf32> to vector<2x96xf32>
    %48 = arith.negf %47 : vector<2x96xf32>
    %49 = math.exp %48 : vector<2x96xf32>
    %cst_13 = arith.constant 1.000000e+00 : f32
    %50 = vector.broadcast %cst_13 : f32 to vector<2x96xf32>
    %51 = arith.addf %50, %49 : vector<2x96xf32>
    %52 = arith.divf %50, %51 : vector<2x96xf32>
    %53 = vector.extract_strided_slice %52 {offsets = [0, 0], sizes = [2, 32], strides = [1, 1]} : vector<2x96xf32> to vector<2x32xf32>
    %54 = vector.extract_strided_slice %52 {offsets = [0, 32], sizes = [2, 32], strides = [1, 1]} : vector<2x96xf32> to vector<2x32xf32>
    %55 = vector.extract_strided_slice %52 {offsets = [0, 64], sizes = [2, 32], strides = [1, 1]} : vector<2x96xf32> to vector<2x32xf32>
    %56 = vector.extract_strided_slice %46 {offsets = [0, 96], sizes = [2, 32], strides = [1, 1]} : vector<2x128xf32> to vector<2x32xf32>
    %57 = math.tanh %56 : vector<2x32xf32>
    %58 = arith.mulf %54, %40 : vector<2x32xf32>
    %59 = arith.mulf %53, %57 : vector<2x32xf32>
    %60 = arith.addf %58, %59 : vector<2x32xf32>
    %61 = math.tanh %60 : vector<2x32xf32>
    %62 = arith.mulf %55, %61 : vector<2x32xf32>
    %63 = vector.extract_strided_slice %19 {offsets = [2, 0], sizes = [1, 128], strides = [1, 1]} : vector<16x128xf32> to vector<1x128xf32>
    %cst_14 = arith.constant dense<0.000000e+00> : vector<2x128xf32>
    %64 = tpu.matmul %62, %10, %cst_14 {dimension_numbers = #tpu.dot_dimension_numbers<[1], [0], [0], [1], [0, 0, 1, 1], [], []>} : vector<2x32xf32>, vector<32x128xf32>, vector<2x128xf32> -> vector<2x128xf32>
    %65 = vector.broadcast %63 : vector<1x128xf32> to vector<2x128xf32>
    %66 = arith.addf %65, %64 : vector<2x128xf32>
    %67 = vector.extract_strided_slice %66 {offsets = [0, 0], sizes = [2, 96], strides = [1, 1]} : vector<2x128xf32> to vector<2x96xf32>
    %68 = arith.negf %67 : vector<2x96xf32>
    %69 = math.exp %68 : vector<2x96xf32>
    %cst_15 = arith.constant 1.000000e+00 : f32
    %70 = vector.broadcast %cst_15 : f32 to vector<2x96xf32>
    %71 = arith.addf %70, %69 : vector<2x96xf32>
    %72 = arith.divf %70, %71 : vector<2x96xf32>
    %73 = vector.extract_strided_slice %72 {offsets = [0, 0], sizes = [2, 32], strides = [1, 1]} : vector<2x96xf32> to vector<2x32xf32>
    %74 = vector.extract_strided_slice %72 {offsets = [0, 32], sizes = [2, 32], strides = [1, 1]} : vector<2x96xf32> to vector<2x32xf32>
    %75 = vector.extract_strided_slice %72 {offsets = [0, 64], sizes = [2, 32], strides = [1, 1]} : vector<2x96xf32> to vector<2x32xf32>
    %76 = vector.extract_strided_slice %66 {offsets = [0, 96], sizes = [2, 32], strides = [1, 1]} : vector<2x128xf32> to vector<2x32xf32>
    %77 = math.tanh %76 : vector<2x32xf32>
    %78 = arith.mulf %74, %60 : vector<2x32xf32>
    %79 = arith.mulf %73, %77 : vector<2x32xf32>
    %80 = arith.addf %78, %79 : vector<2x32xf32>
    %81 = math.tanh %80 : vector<2x32xf32>
    %82 = arith.mulf %75, %81 : vector<2x32xf32>
    %83 = vector.extract_strided_slice %19 {offsets = [3, 0], sizes = [1, 128], strides = [1, 1]} : vector<16x128xf32> to vector<1x128xf32>
    %cst_16 = arith.constant dense<0.000000e+00> : vector<2x128xf32>
    %84 = tpu.matmul %82, %10, %cst_16 {dimension_numbers = #tpu.dot_dimension_numbers<[1], [0], [0], [1], [0, 0, 1, 1], [], []>} : vector<2x32xf32>, vector<32x128xf32>, vector<2x128xf32> -> vector<2x128xf32>
    %85 = vector.broadcast %83 : vector<1x128xf32> to vector<2x128xf32>
    %86 = arith.addf %85, %84 : vector<2x128xf32>
    %87 = vector.extract_strided_slice %86 {offsets = [0, 0], sizes = [2, 96], strides = [1, 1]} : vector<2x128xf32> to vector<2x96xf32>
    %88 = arith.negf %87 : vector<2x96xf32>
    %89 = math.exp %88 : vector<2x96xf32>
    %cst_17 = arith.constant 1.000000e+00 : f32
    %90 = vector.broadcast %cst_17 : f32 to vector<2x96xf32>
    %91 = arith.addf %90, %89 : vector<2x96xf32>
    %92 = arith.divf %90, %91 : vector<2x96xf32>
    %93 = vector.extract_strided_slice %92 {offsets = [0, 0], sizes = [2, 32], strides = [1, 1]} : vector<2x96xf32> to vector<2x32xf32>
    %94 = vector.extract_strided_slice %92 {offsets = [0, 32], sizes = [2, 32], strides = [1, 1]} : vector<2x96xf32> to vector<2x32xf32>
    %95 = vector.extract_strided_slice %92 {offsets = [0, 64], sizes = [2, 32], strides = [1, 1]} : vector<2x96xf32> to vector<2x32xf32>
    %96 = vector.extract_strided_slice %86 {offsets = [0, 96], sizes = [2, 32], strides = [1, 1]} : vector<2x128xf32> to vector<2x32xf32>
    %97 = math.tanh %96 : vector<2x32xf32>
    %98 = arith.mulf %94, %80 : vector<2x32xf32>
    %99 = arith.mulf %93, %97 : vector<2x32xf32>
    %100 = arith.addf %98, %99 : vector<2x32xf32>
    %101 = math.tanh %100 : vector<2x32xf32>
    %102 = arith.mulf %95, %101 : vector<2x32xf32>
    %103 = vector.extract_strided_slice %19 {offsets = [4, 0], sizes = [1, 128], strides = [1, 1]} : vector<16x128xf32> to vector<1x128xf32>
    %cst_18 = arith.constant dense<0.000000e+00> : vector<2x128xf32>
    %104 = tpu.matmul %102, %10, %cst_18 {dimension_numbers = #tpu.dot_dimension_numbers<[1], [0], [0], [1], [0, 0, 1, 1], [], []>} : vector<2x32xf32>, vector<32x128xf32>, vector<2x128xf32> -> vector<2x128xf32>
    %105 = vector.broadcast %103 : vector<1x128xf32> to vector<2x128xf32>
    %106 = arith.addf %105, %104 : vector<2x128xf32>
    %107 = vector.extract_strided_slice %106 {offsets = [0, 0], sizes = [2, 96], strides = [1, 1]} : vector<2x128xf32> to vector<2x96xf32>
    %108 = arith.negf %107 : vector<2x96xf32>
    %109 = math.exp %108 : vector<2x96xf32>
    %cst_19 = arith.constant 1.000000e+00 : f32
    %110 = vector.broadcast %cst_19 : f32 to vector<2x96xf32>
    %111 = arith.addf %110, %109 : vector<2x96xf32>
    %112 = arith.divf %110, %111 : vector<2x96xf32>
    %113 = vector.extract_strided_slice %112 {offsets = [0, 0], sizes = [2, 32], strides = [1, 1]} : vector<2x96xf32> to vector<2x32xf32>
    %114 = vector.extract_strided_slice %112 {offsets = [0, 32], sizes = [2, 32], strides = [1, 1]} : vector<2x96xf32> to vector<2x32xf32>
    %115 = vector.extract_strided_slice %112 {offsets = [0, 64], sizes = [2, 32], strides = [1, 1]} : vector<2x96xf32> to vector<2x32xf32>
    %116 = vector.extract_strided_slice %106 {offsets = [0, 96], sizes = [2, 32], strides = [1, 1]} : vector<2x128xf32> to vector<2x32xf32>
    %117 = math.tanh %116 : vector<2x32xf32>
    %118 = arith.mulf %114, %100 : vector<2x32xf32>
    %119 = arith.mulf %113, %117 : vector<2x32xf32>
    %120 = arith.addf %118, %119 : vector<2x32xf32>
    %121 = math.tanh %120 : vector<2x32xf32>
    %122 = arith.mulf %115, %121 : vector<2x32xf32>
    %123 = vector.extract_strided_slice %19 {offsets = [5, 0], sizes = [1, 128], strides = [1, 1]} : vector<16x128xf32> to vector<1x128xf32>
    %cst_20 = arith.constant dense<0.000000e+00> : vector<2x128xf32>
    %124 = tpu.matmul %122, %10, %cst_20 {dimension_numbers = #tpu.dot_dimension_numbers<[1], [0], [0], [1], [0, 0, 1, 1], [], []>} : vector<2x32xf32>, vector<32x128xf32>, vector<2x128xf32> -> vector<2x128xf32>
    %125 = vector.broadcast %123 : vector<1x128xf32> to vector<2x128xf32>
    %126 = arith.addf %125, %124 : vector<2x128xf32>
    %127 = vector.extract_strided_slice %126 {offsets = [0, 0], sizes = [2, 96], strides = [1, 1]} : vector<2x128xf32> to vector<2x96xf32>
    %128 = arith.negf %127 : vector<2x96xf32>
    %129 = math.exp %128 : vector<2x96xf32>
    %cst_21 = arith.constant 1.000000e+00 : f32
    %130 = vector.broadcast %cst_21 : f32 to vector<2x96xf32>
    %131 = arith.addf %130, %129 : vector<2x96xf32>
    %132 = arith.divf %130, %131 : vector<2x96xf32>
    %133 = vector.extract_strided_slice %132 {offsets = [0, 0], sizes = [2, 32], strides = [1, 1]} : vector<2x96xf32> to vector<2x32xf32>
    %134 = vector.extract_strided_slice %132 {offsets = [0, 32], sizes = [2, 32], strides = [1, 1]} : vector<2x96xf32> to vector<2x32xf32>
    %135 = vector.extract_strided_slice %132 {offsets = [0, 64], sizes = [2, 32], strides = [1, 1]} : vector<2x96xf32> to vector<2x32xf32>
    %136 = vector.extract_strided_slice %126 {offsets = [0, 96], sizes = [2, 32], strides = [1, 1]} : vector<2x128xf32> to vector<2x32xf32>
    %137 = math.tanh %136 : vector<2x32xf32>
    %138 = arith.mulf %134, %120 : vector<2x32xf32>
    %139 = arith.mulf %133, %137 : vector<2x32xf32>
    %140 = arith.addf %138, %139 : vector<2x32xf32>
    %141 = math.tanh %140 : vector<2x32xf32>
    %142 = arith.mulf %135, %141 : vector<2x32xf32>
    %143 = vector.extract_strided_slice %19 {offsets = [6, 0], sizes = [1, 128], strides = [1, 1]} : vector<16x128xf32> to vector<1x128xf32>
    %cst_22 = arith.constant dense<0.000000e+00> : vector<2x128xf32>
    %144 = tpu.matmul %142, %10, %cst_22 {dimension_numbers = #tpu.dot_dimension_numbers<[1], [0], [0], [1], [0, 0, 1, 1], [], []>} : vector<2x32xf32>, vector<32x128xf32>, vector<2x128xf32> -> vector<2x128xf32>
    %145 = vector.broadcast %143 : vector<1x128xf32> to vector<2x128xf32>
    %146 = arith.addf %145, %144 : vector<2x128xf32>
    %147 = vector.extract_strided_slice %146 {offsets = [0, 0], sizes = [2, 96], strides = [1, 1]} : vector<2x128xf32> to vector<2x96xf32>
    %148 = arith.negf %147 : vector<2x96xf32>
    %149 = math.exp %148 : vector<2x96xf32>
    %cst_23 = arith.constant 1.000000e+00 : f32
    %150 = vector.broadcast %cst_23 : f32 to vector<2x96xf32>
    %151 = arith.addf %150, %149 : vector<2x96xf32>
    %152 = arith.divf %150, %151 : vector<2x96xf32>
    %153 = vector.extract_strided_slice %152 {offsets = [0, 0], sizes = [2, 32], strides = [1, 1]} : vector<2x96xf32> to vector<2x32xf32>
    %154 = vector.extract_strided_slice %152 {offsets = [0, 32], sizes = [2, 32], strides = [1, 1]} : vector<2x96xf32> to vector<2x32xf32>
    %155 = vector.extract_strided_slice %152 {offsets = [0, 64], sizes = [2, 32], strides = [1, 1]} : vector<2x96xf32> to vector<2x32xf32>
    %156 = vector.extract_strided_slice %146 {offsets = [0, 96], sizes = [2, 32], strides = [1, 1]} : vector<2x128xf32> to vector<2x32xf32>
    %157 = math.tanh %156 : vector<2x32xf32>
    %158 = arith.mulf %154, %140 : vector<2x32xf32>
    %159 = arith.mulf %153, %157 : vector<2x32xf32>
    %160 = arith.addf %158, %159 : vector<2x32xf32>
    %161 = math.tanh %160 : vector<2x32xf32>
    %162 = arith.mulf %155, %161 : vector<2x32xf32>
    %163 = vector.extract_strided_slice %19 {offsets = [7, 0], sizes = [1, 128], strides = [1, 1]} : vector<16x128xf32> to vector<1x128xf32>
    %cst_24 = arith.constant dense<0.000000e+00> : vector<2x128xf32>
    %164 = tpu.matmul %162, %10, %cst_24 {dimension_numbers = #tpu.dot_dimension_numbers<[1], [0], [0], [1], [0, 0, 1, 1], [], []>} : vector<2x32xf32>, vector<32x128xf32>, vector<2x128xf32> -> vector<2x128xf32>
    %165 = vector.broadcast %163 : vector<1x128xf32> to vector<2x128xf32>
    %166 = arith.addf %165, %164 : vector<2x128xf32>
    %167 = vector.extract_strided_slice %166 {offsets = [0, 0], sizes = [2, 96], strides = [1, 1]} : vector<2x128xf32> to vector<2x96xf32>
    %168 = arith.negf %167 : vector<2x96xf32>
    %169 = math.exp %168 : vector<2x96xf32>
    %cst_25 = arith.constant 1.000000e+00 : f32
    %170 = vector.broadcast %cst_25 : f32 to vector<2x96xf32>
    %171 = arith.addf %170, %169 : vector<2x96xf32>
    %172 = arith.divf %170, %171 : vector<2x96xf32>
    %173 = vector.extract_strided_slice %172 {offsets = [0, 0], sizes = [2, 32], strides = [1, 1]} : vector<2x96xf32> to vector<2x32xf32>
    %174 = vector.extract_strided_slice %172 {offsets = [0, 32], sizes = [2, 32], strides = [1, 1]} : vector<2x96xf32> to vector<2x32xf32>
    %175 = vector.extract_strided_slice %172 {offsets = [0, 64], sizes = [2, 32], strides = [1, 1]} : vector<2x96xf32> to vector<2x32xf32>
    %176 = vector.extract_strided_slice %166 {offsets = [0, 96], sizes = [2, 32], strides = [1, 1]} : vector<2x128xf32> to vector<2x32xf32>
    %177 = math.tanh %176 : vector<2x32xf32>
    %178 = arith.mulf %174, %160 : vector<2x32xf32>
    %179 = arith.mulf %173, %177 : vector<2x32xf32>
    %180 = arith.addf %178, %179 : vector<2x32xf32>
    %181 = math.tanh %180 : vector<2x32xf32>
    %182 = arith.mulf %175, %181 : vector<2x32xf32>
    %cst_26 = arith.constant dense<0.000000e+00> : vector<2x32xf32>
    %183 = tpu.matmul %182, %13, %cst_26 {dimension_numbers = #tpu.dot_dimension_numbers<[1], [0], [0], [1], [0, 0, 1, 1], [], []>} : vector<2x32xf32>, vector<32x32xf32>, vector<2x32xf32> -> vector<2x32xf32>
    %184 = vector.broadcast %14 : vector<1x32xf32> to vector<2x32xf32>
    %185 = arith.addf %183, %184 : vector<2x32xf32>
    %186 = vector.extract_strided_slice %19 {offsets = [8, 0], sizes = [1, 128], strides = [1, 1]} : vector<16x128xf32> to vector<1x128xf32>
    %cst_27 = arith.constant dense<0.000000e+00> : vector<2x128xf32>
    %187 = tpu.matmul %182, %10, %cst_27 {dimension_numbers = #tpu.dot_dimension_numbers<[1], [0], [0], [1], [0, 0, 1, 1], [], []>} : vector<2x32xf32>, vector<32x128xf32>, vector<2x128xf32> -> vector<2x128xf32>
    %188 = vector.broadcast %186 : vector<1x128xf32> to vector<2x128xf32>
    %189 = arith.addf %188, %187 : vector<2x128xf32>
    %190 = vector.extract_strided_slice %189 {offsets = [0, 0], sizes = [2, 96], strides = [1, 1]} : vector<2x128xf32> to vector<2x96xf32>
    %191 = arith.negf %190 : vector<2x96xf32>
    %192 = math.exp %191 : vector<2x96xf32>
    %cst_28 = arith.constant 1.000000e+00 : f32
    %193 = vector.broadcast %cst_28 : f32 to vector<2x96xf32>
    %194 = arith.addf %193, %192 : vector<2x96xf32>
    %195 = arith.divf %193, %194 : vector<2x96xf32>
    %196 = vector.extract_strided_slice %195 {offsets = [0, 0], sizes = [2, 32], strides = [1, 1]} : vector<2x96xf32> to vector<2x32xf32>
    %197 = vector.extract_strided_slice %195 {offsets = [0, 32], sizes = [2, 32], strides = [1, 1]} : vector<2x96xf32> to vector<2x32xf32>
    %198 = vector.extract_strided_slice %195 {offsets = [0, 64], sizes = [2, 32], strides = [1, 1]} : vector<2x96xf32> to vector<2x32xf32>
    %199 = vector.extract_strided_slice %189 {offsets = [0, 96], sizes = [2, 32], strides = [1, 1]} : vector<2x128xf32> to vector<2x32xf32>
    %200 = math.tanh %199 : vector<2x32xf32>
    %201 = arith.mulf %197, %180 : vector<2x32xf32>
    %202 = arith.mulf %196, %200 : vector<2x32xf32>
    %203 = arith.addf %201, %202 : vector<2x32xf32>
    %204 = math.tanh %203 : vector<2x32xf32>
    %205 = arith.mulf %198, %204 : vector<2x32xf32>
    %206 = vector.extract_strided_slice %19 {offsets = [9, 0], sizes = [1, 128], strides = [1, 1]} : vector<16x128xf32> to vector<1x128xf32>
    %cst_29 = arith.constant dense<0.000000e+00> : vector<2x128xf32>
    %207 = tpu.matmul %205, %10, %cst_29 {dimension_numbers = #tpu.dot_dimension_numbers<[1], [0], [0], [1], [0, 0, 1, 1], [], []>} : vector<2x32xf32>, vector<32x128xf32>, vector<2x128xf32> -> vector<2x128xf32>
    %208 = vector.broadcast %206 : vector<1x128xf32> to vector<2x128xf32>
    %209 = arith.addf %208, %207 : vector<2x128xf32>
    %210 = vector.extract_strided_slice %209 {offsets = [0, 0], sizes = [2, 96], strides = [1, 1]} : vector<2x128xf32> to vector<2x96xf32>
    %211 = arith.negf %210 : vector<2x96xf32>
    %212 = math.exp %211 : vector<2x96xf32>
    %cst_30 = arith.constant 1.000000e+00 : f32
    %213 = vector.broadcast %cst_30 : f32 to vector<2x96xf32>
    %214 = arith.addf %213, %212 : vector<2x96xf32>
    %215 = arith.divf %213, %214 : vector<2x96xf32>
    %216 = vector.extract_strided_slice %215 {offsets = [0, 0], sizes = [2, 32], strides = [1, 1]} : vector<2x96xf32> to vector<2x32xf32>
    %217 = vector.extract_strided_slice %215 {offsets = [0, 32], sizes = [2, 32], strides = [1, 1]} : vector<2x96xf32> to vector<2x32xf32>
    %218 = vector.extract_strided_slice %215 {offsets = [0, 64], sizes = [2, 32], strides = [1, 1]} : vector<2x96xf32> to vector<2x32xf32>
    %219 = vector.extract_strided_slice %209 {offsets = [0, 96], sizes = [2, 32], strides = [1, 1]} : vector<2x128xf32> to vector<2x32xf32>
    %220 = math.tanh %219 : vector<2x32xf32>
    %221 = arith.mulf %217, %203 : vector<2x32xf32>
    %222 = arith.mulf %216, %220 : vector<2x32xf32>
    %223 = arith.addf %221, %222 : vector<2x32xf32>
    %224 = math.tanh %223 : vector<2x32xf32>
    %225 = arith.mulf %218, %224 : vector<2x32xf32>
    %226 = vector.extract_strided_slice %19 {offsets = [10, 0], sizes = [1, 128], strides = [1, 1]} : vector<16x128xf32> to vector<1x128xf32>
    %cst_31 = arith.constant dense<0.000000e+00> : vector<2x128xf32>
    %227 = tpu.matmul %225, %10, %cst_31 {dimension_numbers = #tpu.dot_dimension_numbers<[1], [0], [0], [1], [0, 0, 1, 1], [], []>} : vector<2x32xf32>, vector<32x128xf32>, vector<2x128xf32> -> vector<2x128xf32>
    %228 = vector.broadcast %226 : vector<1x128xf32> to vector<2x128xf32>
    %229 = arith.addf %228, %227 : vector<2x128xf32>
    %230 = vector.extract_strided_slice %229 {offsets = [0, 0], sizes = [2, 96], strides = [1, 1]} : vector<2x128xf32> to vector<2x96xf32>
    %231 = arith.negf %230 : vector<2x96xf32>
    %232 = math.exp %231 : vector<2x96xf32>
    %cst_32 = arith.constant 1.000000e+00 : f32
    %233 = vector.broadcast %cst_32 : f32 to vector<2x96xf32>
    %234 = arith.addf %233, %232 : vector<2x96xf32>
    %235 = arith.divf %233, %234 : vector<2x96xf32>
    %236 = vector.extract_strided_slice %235 {offsets = [0, 0], sizes = [2, 32], strides = [1, 1]} : vector<2x96xf32> to vector<2x32xf32>
    %237 = vector.extract_strided_slice %235 {offsets = [0, 32], sizes = [2, 32], strides = [1, 1]} : vector<2x96xf32> to vector<2x32xf32>
    %238 = vector.extract_strided_slice %235 {offsets = [0, 64], sizes = [2, 32], strides = [1, 1]} : vector<2x96xf32> to vector<2x32xf32>
    %239 = vector.extract_strided_slice %229 {offsets = [0, 96], sizes = [2, 32], strides = [1, 1]} : vector<2x128xf32> to vector<2x32xf32>
    %240 = math.tanh %239 : vector<2x32xf32>
    %241 = arith.mulf %237, %223 : vector<2x32xf32>
    %242 = arith.mulf %236, %240 : vector<2x32xf32>
    %243 = arith.addf %241, %242 : vector<2x32xf32>
    %244 = math.tanh %243 : vector<2x32xf32>
    %245 = arith.mulf %238, %244 : vector<2x32xf32>
    %246 = vector.extract_strided_slice %19 {offsets = [11, 0], sizes = [1, 128], strides = [1, 1]} : vector<16x128xf32> to vector<1x128xf32>
    %cst_33 = arith.constant dense<0.000000e+00> : vector<2x128xf32>
    %247 = tpu.matmul %245, %10, %cst_33 {dimension_numbers = #tpu.dot_dimension_numbers<[1], [0], [0], [1], [0, 0, 1, 1], [], []>} : vector<2x32xf32>, vector<32x128xf32>, vector<2x128xf32> -> vector<2x128xf32>
    %248 = vector.broadcast %246 : vector<1x128xf32> to vector<2x128xf32>
    %249 = arith.addf %248, %247 : vector<2x128xf32>
    %250 = vector.extract_strided_slice %249 {offsets = [0, 0], sizes = [2, 96], strides = [1, 1]} : vector<2x128xf32> to vector<2x96xf32>
    %251 = arith.negf %250 : vector<2x96xf32>
    %252 = math.exp %251 : vector<2x96xf32>
    %cst_34 = arith.constant 1.000000e+00 : f32
    %253 = vector.broadcast %cst_34 : f32 to vector<2x96xf32>
    %254 = arith.addf %253, %252 : vector<2x96xf32>
    %255 = arith.divf %253, %254 : vector<2x96xf32>
    %256 = vector.extract_strided_slice %255 {offsets = [0, 0], sizes = [2, 32], strides = [1, 1]} : vector<2x96xf32> to vector<2x32xf32>
    %257 = vector.extract_strided_slice %255 {offsets = [0, 32], sizes = [2, 32], strides = [1, 1]} : vector<2x96xf32> to vector<2x32xf32>
    %258 = vector.extract_strided_slice %255 {offsets = [0, 64], sizes = [2, 32], strides = [1, 1]} : vector<2x96xf32> to vector<2x32xf32>
    %259 = vector.extract_strided_slice %249 {offsets = [0, 96], sizes = [2, 32], strides = [1, 1]} : vector<2x128xf32> to vector<2x32xf32>
    %260 = math.tanh %259 : vector<2x32xf32>
    %261 = arith.mulf %257, %243 : vector<2x32xf32>
    %262 = arith.mulf %256, %260 : vector<2x32xf32>
    %263 = arith.addf %261, %262 : vector<2x32xf32>
    %264 = math.tanh %263 : vector<2x32xf32>
    %265 = arith.mulf %258, %264 : vector<2x32xf32>
    %266 = vector.extract_strided_slice %19 {offsets = [12, 0], sizes = [1, 128], strides = [1, 1]} : vector<16x128xf32> to vector<1x128xf32>
    %cst_35 = arith.constant dense<0.000000e+00> : vector<2x128xf32>
    %267 = tpu.matmul %265, %10, %cst_35 {dimension_numbers = #tpu.dot_dimension_numbers<[1], [0], [0], [1], [0, 0, 1, 1], [], []>} : vector<2x32xf32>, vector<32x128xf32>, vector<2x128xf32> -> vector<2x128xf32>
    %268 = vector.broadcast %266 : vector<1x128xf32> to vector<2x128xf32>
    %269 = arith.addf %268, %267 : vector<2x128xf32>
    %270 = vector.extract_strided_slice %269 {offsets = [0, 0], sizes = [2, 96], strides = [1, 1]} : vector<2x128xf32> to vector<2x96xf32>
    %271 = arith.negf %270 : vector<2x96xf32>
    %272 = math.exp %271 : vector<2x96xf32>
    %cst_36 = arith.constant 1.000000e+00 : f32
    %273 = vector.broadcast %cst_36 : f32 to vector<2x96xf32>
    %274 = arith.addf %273, %272 : vector<2x96xf32>
    %275 = arith.divf %273, %274 : vector<2x96xf32>
    %276 = vector.extract_strided_slice %275 {offsets = [0, 0], sizes = [2, 32], strides = [1, 1]} : vector<2x96xf32> to vector<2x32xf32>
    %277 = vector.extract_strided_slice %275 {offsets = [0, 32], sizes = [2, 32], strides = [1, 1]} : vector<2x96xf32> to vector<2x32xf32>
    %278 = vector.extract_strided_slice %275 {offsets = [0, 64], sizes = [2, 32], strides = [1, 1]} : vector<2x96xf32> to vector<2x32xf32>
    %279 = vector.extract_strided_slice %269 {offsets = [0, 96], sizes = [2, 32], strides = [1, 1]} : vector<2x128xf32> to vector<2x32xf32>
    %280 = math.tanh %279 : vector<2x32xf32>
    %281 = arith.mulf %277, %263 : vector<2x32xf32>
    %282 = arith.mulf %276, %280 : vector<2x32xf32>
    %283 = arith.addf %281, %282 : vector<2x32xf32>
    %284 = math.tanh %283 : vector<2x32xf32>
    %285 = arith.mulf %278, %284 : vector<2x32xf32>
    %286 = vector.extract_strided_slice %19 {offsets = [13, 0], sizes = [1, 128], strides = [1, 1]} : vector<16x128xf32> to vector<1x128xf32>
    %cst_37 = arith.constant dense<0.000000e+00> : vector<2x128xf32>
    %287 = tpu.matmul %285, %10, %cst_37 {dimension_numbers = #tpu.dot_dimension_numbers<[1], [0], [0], [1], [0, 0, 1, 1], [], []>} : vector<2x32xf32>, vector<32x128xf32>, vector<2x128xf32> -> vector<2x128xf32>
    %288 = vector.broadcast %286 : vector<1x128xf32> to vector<2x128xf32>
    %289 = arith.addf %288, %287 : vector<2x128xf32>
    %290 = vector.extract_strided_slice %289 {offsets = [0, 0], sizes = [2, 96], strides = [1, 1]} : vector<2x128xf32> to vector<2x96xf32>
    %291 = arith.negf %290 : vector<2x96xf32>
    %292 = math.exp %291 : vector<2x96xf32>
    %cst_38 = arith.constant 1.000000e+00 : f32
    %293 = vector.broadcast %cst_38 : f32 to vector<2x96xf32>
    %294 = arith.addf %293, %292 : vector<2x96xf32>
    %295 = arith.divf %293, %294 : vector<2x96xf32>
    %296 = vector.extract_strided_slice %295 {offsets = [0, 0], sizes = [2, 32], strides = [1, 1]} : vector<2x96xf32> to vector<2x32xf32>
    %297 = vector.extract_strided_slice %295 {offsets = [0, 32], sizes = [2, 32], strides = [1, 1]} : vector<2x96xf32> to vector<2x32xf32>
    %298 = vector.extract_strided_slice %295 {offsets = [0, 64], sizes = [2, 32], strides = [1, 1]} : vector<2x96xf32> to vector<2x32xf32>
    %299 = vector.extract_strided_slice %289 {offsets = [0, 96], sizes = [2, 32], strides = [1, 1]} : vector<2x128xf32> to vector<2x32xf32>
    %300 = math.tanh %299 : vector<2x32xf32>
    %301 = arith.mulf %297, %283 : vector<2x32xf32>
    %302 = arith.mulf %296, %300 : vector<2x32xf32>
    %303 = arith.addf %301, %302 : vector<2x32xf32>
    %304 = math.tanh %303 : vector<2x32xf32>
    %305 = arith.mulf %298, %304 : vector<2x32xf32>
    %306 = vector.extract_strided_slice %19 {offsets = [14, 0], sizes = [1, 128], strides = [1, 1]} : vector<16x128xf32> to vector<1x128xf32>
    %cst_39 = arith.constant dense<0.000000e+00> : vector<2x128xf32>
    %307 = tpu.matmul %305, %10, %cst_39 {dimension_numbers = #tpu.dot_dimension_numbers<[1], [0], [0], [1], [0, 0, 1, 1], [], []>} : vector<2x32xf32>, vector<32x128xf32>, vector<2x128xf32> -> vector<2x128xf32>
    %308 = vector.broadcast %306 : vector<1x128xf32> to vector<2x128xf32>
    %309 = arith.addf %308, %307 : vector<2x128xf32>
    %310 = vector.extract_strided_slice %309 {offsets = [0, 0], sizes = [2, 96], strides = [1, 1]} : vector<2x128xf32> to vector<2x96xf32>
    %311 = arith.negf %310 : vector<2x96xf32>
    %312 = math.exp %311 : vector<2x96xf32>
    %cst_40 = arith.constant 1.000000e+00 : f32
    %313 = vector.broadcast %cst_40 : f32 to vector<2x96xf32>
    %314 = arith.addf %313, %312 : vector<2x96xf32>
    %315 = arith.divf %313, %314 : vector<2x96xf32>
    %316 = vector.extract_strided_slice %315 {offsets = [0, 0], sizes = [2, 32], strides = [1, 1]} : vector<2x96xf32> to vector<2x32xf32>
    %317 = vector.extract_strided_slice %315 {offsets = [0, 32], sizes = [2, 32], strides = [1, 1]} : vector<2x96xf32> to vector<2x32xf32>
    %318 = vector.extract_strided_slice %315 {offsets = [0, 64], sizes = [2, 32], strides = [1, 1]} : vector<2x96xf32> to vector<2x32xf32>
    %319 = vector.extract_strided_slice %309 {offsets = [0, 96], sizes = [2, 32], strides = [1, 1]} : vector<2x128xf32> to vector<2x32xf32>
    %320 = math.tanh %319 : vector<2x32xf32>
    %321 = arith.mulf %317, %303 : vector<2x32xf32>
    %322 = arith.mulf %316, %320 : vector<2x32xf32>
    %323 = arith.addf %321, %322 : vector<2x32xf32>
    %324 = math.tanh %323 : vector<2x32xf32>
    %325 = arith.mulf %318, %324 : vector<2x32xf32>
    %326 = vector.extract_strided_slice %19 {offsets = [15, 0], sizes = [1, 128], strides = [1, 1]} : vector<16x128xf32> to vector<1x128xf32>
    %cst_41 = arith.constant dense<0.000000e+00> : vector<2x128xf32>
    %327 = tpu.matmul %325, %10, %cst_41 {dimension_numbers = #tpu.dot_dimension_numbers<[1], [0], [0], [1], [0, 0, 1, 1], [], []>} : vector<2x32xf32>, vector<32x128xf32>, vector<2x128xf32> -> vector<2x128xf32>
    %328 = vector.broadcast %326 : vector<1x128xf32> to vector<2x128xf32>
    %329 = arith.addf %328, %327 : vector<2x128xf32>
    %330 = vector.extract_strided_slice %329 {offsets = [0, 0], sizes = [2, 96], strides = [1, 1]} : vector<2x128xf32> to vector<2x96xf32>
    %331 = arith.negf %330 : vector<2x96xf32>
    %332 = math.exp %331 : vector<2x96xf32>
    %cst_42 = arith.constant 1.000000e+00 : f32
    %333 = vector.broadcast %cst_42 : f32 to vector<2x96xf32>
    %334 = arith.addf %333, %332 : vector<2x96xf32>
    %335 = arith.divf %333, %334 : vector<2x96xf32>
    %336 = vector.extract_strided_slice %335 {offsets = [0, 0], sizes = [2, 32], strides = [1, 1]} : vector<2x96xf32> to vector<2x32xf32>
    %337 = vector.extract_strided_slice %335 {offsets = [0, 32], sizes = [2, 32], strides = [1, 1]} : vector<2x96xf32> to vector<2x32xf32>
    %338 = vector.extract_strided_slice %335 {offsets = [0, 64], sizes = [2, 32], strides = [1, 1]} : vector<2x96xf32> to vector<2x32xf32>
    %339 = vector.extract_strided_slice %329 {offsets = [0, 96], sizes = [2, 32], strides = [1, 1]} : vector<2x128xf32> to vector<2x32xf32>
    %340 = math.tanh %339 : vector<2x32xf32>
    %341 = arith.mulf %337, %323 : vector<2x32xf32>
    %342 = arith.mulf %336, %340 : vector<2x32xf32>
    %343 = arith.addf %341, %342 : vector<2x32xf32>
    %344 = math.tanh %343 : vector<2x32xf32>
    %345 = arith.mulf %338, %344 : vector<2x32xf32>
    %cst_43 = arith.constant dense<0.000000e+00> : vector<2x32xf32>
    %346 = tpu.matmul %345, %13, %cst_43 {dimension_numbers = #tpu.dot_dimension_numbers<[1], [0], [0], [1], [0, 0, 1, 1], [], []>} : vector<2x32xf32>, vector<32x32xf32>, vector<2x32xf32> -> vector<2x32xf32>
    %347 = vector.broadcast %14 : vector<1x32xf32> to vector<2x32xf32>
    %348 = arith.addf %346, %347 : vector<2x32xf32>
    %349 = tpu.concatenate %185, %348 in 0 : vector<2x32xf32>, vector<2x32xf32> -> vector<4x32xf32>
    %cst_44 = arith.constant dense<0.000000e+00> : vector<4x5xf32>
    %350 = tpu.matmul %349, %15, %cst_44 {dimension_numbers = #tpu.dot_dimension_numbers<[1], [0], [0], [1], [0, 0, 1, 1], [], []>} : vector<4x32xf32>, vector<32x5xf32>, vector<4x5xf32> -> vector<4x5xf32>
    %351 = vector.broadcast %16 : vector<1x5xf32> to vector<4x5xf32>
    %352 = arith.addf %350, %351 : vector<4x5xf32>
    %353 = tpu.concatenate %349, %345, %343 in 0 : vector<4x32xf32>, vector<2x32xf32>, vector<2x32xf32> -> vector<8x32xf32>
    %cst_45 = arith.constant 0.000000e+00 : f32
    %354 = vector.broadcast %cst_45 : f32 to vector<4x91xf32>
    %355 = tpu.concatenate %352, %354 in 1 : vector<4x5xf32>, vector<4x91xf32> -> vector<4x96xf32>
    %cst_46 = arith.constant 0.000000e+00 : f32
    %356 = vector.broadcast %cst_46 : f32 to vector<4x96xf32>
    %357 = tpu.concatenate %355, %356 in 0 : vector<4x96xf32>, vector<4x96xf32> -> vector<8x96xf32>
    %358 = tpu.concatenate %353, %357 in 1 : vector<8x32xf32>, vector<8x96xf32> -> vector<8x128xf32>
    %c0_47 = arith.constant 0 : index
    %c0_48 = arith.constant 0 : index
    %359 = vector.load %arg5[%c0_47, %c0_48] : memref<8x128xf32, #tpu.memory_space<vmem>>, vector<8x128xf32>
    tpu.vector_store %arg5[%c0_47, %c0_48], %358 {strides = array<i32>} : memref<8x128xf32, #tpu.memory_space<vmem>>, vector<8x128xf32>,
    return
  }
}

</mosaic_0001>

<llo_original>
// kernel: sentiment_rnn_forward.1
$region0: #{sentiment_rnn_forward.1}
  #allocation0 [shape = 'u32[]', space=smem, size = 0x4, offset = 0x4, fixed_abs, tag = 'smem constant byte address 0x4 - core index']
  #allocation1 [shape = 'u32[144,128]{1,0:T(1,128)}', space=vmem, size = 0x12000, scoped, tag = 'internal scratch']
  %s0 = inlined_call_operand.vmem [shape: s32[16,1], index: 0, kind: input, shape index: {}]
  %s1 = inlined_call_operand.vmem [shape: f32[50,16], index: 1, kind: input, shape index: {}]
  %s2 = inlined_call_operand.vmem [shape: f32[49,128], index: 2, kind: input, shape index: {}]
  %s3 = inlined_call_operand.vmem [shape: f32[33,37], index: 3, kind: input, shape index: {}]
  %s4 = inlined_call_operand.vmem [shape: f32[4,32], index: 4, kind: input, shape index: {}]
  %s5 = inlined_call_operand.vmem [shape: f32[8,128], index: 5, kind: output, shape index: {}]
  %s6 = sld [smem:[#allocation0]]
  $region30: #{sentiment_rnn_forward.1} parent=0
    _
  %s8 = ssub.s32 1, %s6
  %s9 = scalar_select 0, %s8, %s6
  // Predicated region
  $region2: #{sentiment_rnn_forward.1} parent=0 // pred_check
    _
  $region3: #{sentiment_rnn_forward.1} parent=0 // pred_check_branch
    %11 = sbr.rel (0) target = $region5
  $region4: #{sentiment_rnn_forward.1} parent=0 // pred_region
    _
  $region5: #{sentiment_rnn_forward.1} parent=0 // pred_fallthru
    _
  // Predicated region
  $region6: #{sentiment_rnn_forward.1} parent=0 // pred_check
    _
  $region7: #{sentiment_rnn_forward.1} parent=0 // pred_check_branch
    %13 = sbr.rel (0) target = $region9
  $region8: #{sentiment_rnn_forward.1} parent=0 // pred_region
    _
  $region9: #{sentiment_rnn_forward.1} parent=0 // pred_fallthru
    _
  // Predicated region
  $region10: #{sentiment_rnn_forward.1} parent=0 // pred_check
    _
  $region11: #{sentiment_rnn_forward.1} parent=0 // pred_check_branch
    %15 = sbr.rel (0) target = $region13
  $region12: #{sentiment_rnn_forward.1} parent=0 // pred_region
    _
  $region13: #{sentiment_rnn_forward.1} parent=0 // pred_fallthru
    _
  // Predicated region
  $region14: #{sentiment_rnn_forward.1} parent=0 // pred_check
    _
  $region15: #{sentiment_rnn_forward.1} parent=0 // pred_check_branch
    %17 = sbr.rel (0) target = $region17
  $region16: #{sentiment_rnn_forward.1} parent=0 // pred_region
    _
  $region17: #{sentiment_rnn_forward.1} parent=0 // pred_fallthru
    _
  // Predicated region
  $region18: #{sentiment_rnn_forward.1} parent=0 // pred_check
    _
  $region19: #{sentiment_rnn_forward.1} parent=0 // pred_check_branch
    %19 = sbr.rel (0) target = $region21
  $region20: #{sentiment_rnn_forward.1} parent=0 // pred_region
    _
  $region21: #{sentiment_rnn_forward.1} parent=0 // pred_fallthru
    _
  %v20 = vld [vmem:[%s0] sm:$0xff]
  %v21 = vld [vmem:[%s0 + $0x8] sm:$0xff]
  %v22 = vlaneseq
  %v23 = vand.u32 %v22, 127
  %24 = vset.pattern.permute.xlu0 0
  %25 = vperm.xlu0 %24, %v20
  %v26 = vpop.permute.xlu0 %25
  %27 = vset.pattern.permute.xlu0 0
  %28 = vperm.xlu0 %27, %v21
  %v29 = vpop.permute.xlu0 %28
  %vm30 = vcmp.eq.s32.totalorder %v23, %v26
  %vm31 = vcmp.eq.s32.totalorder %v23, %v29
  %v32 = vsel %vm30, 1, 0
  %v33 = vsel %vm31, 1, 0
  %v34 = vcvt.s32.f32 %v32
  %v35 = vcvt.s32.f32 %v33
  %v36 = vld [vmem:[%s1] sm:$0xff]
  %v37 = vld [vmem:[%s1 + $0x8] sm:$0xff]
  %v38 = vld [vmem:[%s1 + $0x10] sm:$0xff]
  %v39 = vld [vmem:[%s1 + $0x18] sm:$0xff]
  %v40 = vld [vmem:[%s1 + $0x20] sm:$0xff]
  %v41 = vld [vmem:[%s1 + $0x28] sm:$0xff]
  %v42 = vld [vmem:[%s1 + $0x30] sm:$0x3]
  %vm43 = vcmask 408576
  %v45 = vsel %vm43, %v34, 0
  %v48 = vsel %vm43, %v35, 0
  %vm50 = vcmask 1041408
  %v52 = vsel %vm50, %v42, 0
  %54 = vmatprep.subr.mxu0 0.0
  %55 = vmatpush1.msra.mxu0 0.0
  %56 = vmatprep.subr.mxu0 0.0
  %57 = vmatpush1.msra.mxu0 0.0
  %58 = vmatprep.subr.mxu0 0.0
  %59 = vmatpush1.msra.mxu0 0.0
  %60 = vmatprep.subr.mxu0 0.0
  %61 = vmatpush1.msra.mxu0 0.0
  %62 = vmatprep.subr.mxu0 0.0
  %63 = vmatpush1.msra.mxu0 0.0
  %64 = vmatprep.subr.mxu0 0.0
  %65 = vmatpush1.msra.mxu0 0.0
  %66 = vmatprep.subr.mxu0 0.0
  %67 = vmatpush1.msra.mxu0 0.0
  %68 = vmatprep.subr.mxu0 0.0
  %69 = vmatpush1.msra.mxu0 0.0
  %70 = vmatprep.subr.mxu0 0.0
  %71 = vmatpush1.msra.mxu0 0.0
  %72 = vmatprep.subr.mxu0 0.0
  %73 = vmatpush1.msra.mxu0 %v52
  %74 = vmatprep.subr.mxu0 0.0
  %75 = vmatpush1.msra.mxu0 %v41
  %76 = vmatprep.subr.mxu0 0.0
  %77 = vmatpush1.msra.mxu0 %v40
  %78 = vmatprep.subr.mxu0 0.0
  %79 = vmatpush1.msra.mxu0 %v39
  %80 = vmatprep.subr.mxu0 0.0
  %81 = vmatpush1.msra.mxu0 %v38
  %82 = vmatprep.subr.mxu0 0.0
  %83 = vmatpush1.msra.mxu0 %v37
  %84 = vmatprep.subr.mxu0 0.0
  %85 = vmatpush1.msra.mxu0 %v36
  %86 = vmatprep.subr.mxu0 0.0
  %87 = vmatpush2.msra.mxu0 0.0
  %88 = vmatprep.subr.mxu0 0.0
  %89 = vmatpush2.msra.mxu0 0.0
  %90 = vmatprep.subr.mxu0 0.0
  %91 = vmatpush2.msra.mxu0 0.0
  %92 = vmatprep.subr.mxu0 0.0
  %93 = vmatpush2.msra.mxu0 0.0
  %94 = vmatprep.subr.mxu0 0.0
  %95 = vmatpush2.msra.mxu0 0.0
  %96 = vmatprep.subr.mxu0 0.0
  %97 = vmatpush2.msra.mxu0 0.0
  %98 = vmatprep.subr.mxu0 0.0
  %99 = vmatpush2.msra.mxu0 0.0
  %100 = vmatprep.subr.mxu0 0.0
  %101 = vmatpush2.msra.mxu0 0.0
  %102 = vmatprep.subr.mxu0 0.0
  %103 = vmatpush2.msra.mxu0 0.0
  %104 = vmatprep.subr.mxu0 0.0
  %105 = vmatpush2.msra.mxu0 0.0
  %106 = vmatprep.subr.mxu0 0.0
  %107 = vmatpush2.msra.mxu0 0.0
  %108 = vmatprep.subr.mxu0 0.0
  %109 = vmatpush2.msra.mxu0 0.0
  %110 = vmatprep.subr.mxu0 0.0
  %111 = vmatpush2.msra.mxu0 0.0
  %112 = vmatprep.subr.mxu0 0.0
  %113 = vmatpush2.msra.mxu0 0.0
  %114 = vmatprep.subr.mxu0 0.0
  %115 = vmatpush2.msra.mxu0 0.0
  %116 = vmatprep.subr.mxu0 0.0
  %117 = vmatpush2.msra.mxu0 0.0
  %118 = vmatprep.mubr.f32.mxu0 0.0
  %119 = vmatmul.mubr.f32.gmra.mxu0 %v45
  %v120 = vpop.f32.mrf.mxu0
  %v121 = vadd.f32 0.0, %v120
  %v122 = vpop.f32.mrf.mxu0
  %123 = vmatprep.mubr.f32.mxu0 0.0
  %124 = vmatmul.mubr.f32.gmra.mxu0 %v48
  %v125 = vpop.f32.mrf.mxu0
  %v126 = vadd.f32 0.0, %v125
  %v127 = vpop.f32.mrf.mxu0
  %128 = vdwg.mxu0
  %v129 = vld [vmem:[%s2] sm:$0xff]
  %v130 = vld [vmem:[%s2 + $0x8] sm:$0xff]
  %v131 = vld [vmem:[%s2 + $0x10] sm:$0xff]
  %v132 = vld [vmem:[%s2 + $0x18] sm:$0xff]
  %v133 = vld [vmem:[%s2 + $0x20] sm:$0xff]
  %v134 = vld [vmem:[%s2 + $0x28] sm:$0xff]
  %v135 = vld [vmem:[%s2 + $0x30] sm:$0x1]
  %v136 = vld [vmem:[%s3] sm:$0xff]
  %v137 = vld [vmem:[%s3 + $0x8] sm:$0xff]
  %v138 = vld [vmem:[%s3 + $0x10] sm:$0xff]
  %v139 = vld [vmem:[%s3 + $0x18] sm:$0xff]
  %v140 = vld [vmem:[%s3 + $0x20] sm:$0x1]
  %v141 = vlaneseq
  %v142 = vshrl.u32 %v141, 7
  %v143 = vsub.s32 0, %v142
  %v144 = vrot.slane %v135, %v143
  %vm145 = vcmask 130048
  %v147 = vsel %vm145, %v121, 0
  %v150 = vsel %vm145, %v126, 0
  %152 = vmatprep.subr.mxu0 0.0
  %153 = vmatpush1.msra.mxu0 0.0
  %154 = vmatprep.subr.mxu0 0.0
  %155 = vmatpush1.msra.mxu0 0.0
  %156 = vmatprep.subr.mxu0 0.0
  %157 = vmatpush1.msra.mxu0 0.0
  %158 = vmatprep.subr.mxu0 0.0
  %159 = vmatpush1.msra.mxu0 0.0
  %160 = vmatprep.subr.mxu0 0.0
  %161 = vmatpush1.msra.mxu0 0.0
  %162 = vmatprep.subr.mxu0 0.0
  %163 = vmatpush1.msra.mxu0 0.0
  %164 = vmatprep.subr.mxu0 0.0
  %165 = vmatpush1.msra.mxu0 0.0
  %166 = vmatprep.subr.mxu0 0.0
  %167 = vmatpush1.msra.mxu0 0.0
  %168 = vmatprep.subr.mxu0 0.0
  %169 = vmatpush1.msra.mxu0 0.0
  %170 = vmatprep.subr.mxu0 0.0
  %171 = vmatpush1.msra.mxu0 0.0
  %172 = vmatprep.subr.mxu0 0.0
  %173 = vmatpush1.msra.mxu0 0.0
  %174 = vmatprep.subr.mxu0 0.0
  %175 = vmatpush1.msra.mxu0 0.0
  %176 = vmatprep.subr.mxu0 0.0
  %177 = vmatpush1.msra.mxu0 0.0
  %178 = vmatprep.subr.mxu0 0.0
  %179 = vmatpush1.msra.mxu0 0.0
  %180 = vmatprep.subr.mxu0 0.0
  %181 = vmatpush1.msra.mxu0 %v130
  %182 = vmatprep.subr.mxu0 0.0
  %183 = vmatpush1.msra.mxu0 %v129
  %184 = vmatprep.subr.mxu0 0.0
  %185 = vmatpush2.msra.mxu0 0.0
  %186 = vmatprep.subr.mxu0 0.0
  %187 = vmatpush2.msra.mxu0 0.0
  %188 = vmatprep.subr.mxu0 0.0
  %189 = vmatpush2.msra.mxu0 0.0
  %190 = vmatprep.subr.mxu0 0.0
  %191 = vmatpush2.msra.mxu0 0.0
  %192 = vmatprep.subr.mxu0 0.0
  %193 = vmatpush2.msra.mxu0 0.0
  %194 = vmatprep.subr.mxu0 0.0
  %195 = vmatpush2.msra.mxu0 0.0
  %196 = vmatprep.subr.mxu0 0.0
  %197 = vmatpush2.msra.mxu0 0.0
  %198 = vmatprep.subr.mxu0 0.0
  %199 = vmatpush2.msra.mxu0 0.0
  %200 = vmatprep.subr.mxu0 0.0
  %201 = vmatpush2.msra.mxu0 0.0
  %202 = vmatprep.subr.mxu0 0.0
  %203 = vmatpush2.msra.mxu0 0.0
  %204 = vmatprep.subr.mxu0 0.0
  %205 = vmatpush2.msra.mxu0 0.0
  %206 = vmatprep.subr.mxu0 0.0
  %207 = vmatpush2.msra.mxu0 0.0
  %208 = vmatprep.subr.mxu0 0.0
  %209 = vmatpush2.msra.mxu0 0.0
  %210 = vmatprep.subr.mxu0 0.0
  %211 = vmatpush2.msra.mxu0 0.0
  %212 = vmatprep.subr.mxu0 0.0
  %213 = vmatpush2.msra.mxu0 0.0
  %214 = vmatprep.subr.mxu0 0.0
  %215 = vmatpush2.msra.mxu0 0.0
  %216 = vmatprep.mubr.f32.mxu0 0.0
  %217 = vmatmul.mubr.f32.gmra.mxu0 %v147
  %v218 = vpop.f32.mrf.mxu0
  %v219 = vadd.f32 %v144, %v218
  %v220 = vpop.f32.mrf.mxu0
  %221 = vmatprep.mubr.f32.mxu0 0.0
  %222 = vmatmul.mubr.f32.gmra.mxu0 %v150
  %v223 = vpop.f32.mrf.mxu0
  %v224 = vadd.f32 %v144, %v223
  %v225 = vpop.f32.mrf.mxu0
  %226 = vdwg.mxu0
  %v227 = vld [vmem:[%s4] sm:$0xf]
  %vm228 = vcmask 261120
  %v230 = vsel %vm228, %v227, 0
  %232 = vmatprep.subr.mxu0 0.0
  %233 = vmatpush1.msra.mxu0 0.0
  %234 = vmatprep.subr.mxu0 0.0
  %235 = vmatpush1.msra.mxu0 0.0
  %236 = vmatprep.subr.mxu0 0.0
  %237 = vmatpush1.msra.mxu0 0.0
  %238 = vmatprep.subr.mxu0 0.0
  %239 = vmatpush1.msra.mxu0 0.0
  %240 = vmatprep.subr.mxu0 0.0
  %241 = vmatpush1.msra.mxu0 0.0
  %242 = vmatprep.subr.mxu0 0.0
  %243 = vmatpush1.msra.mxu0 0.0
  %244 = vmatprep.subr.mxu0 0.0
  %245 = vmatpush1.msra.mxu0 0.0
  %246 = vmatprep.subr.mxu0 0.0
  %247 = vmatpush1.msra.mxu0 0.0
  %248 = vmatprep.subr.mxu0 0.0
  %249 = vmatpush1.msra.mxu0 0.0
  %250 = vmatprep.subr.mxu0 0.0
  %251 = vmatpush1.msra.mxu0 0.0
  %252 = vmatprep.subr.mxu0 0.0
  %253 = vmatpush1.msra.mxu0 0.0
  %254 = vmatprep.subr.mxu0 0.0
  %255 = vmatpush1.msra.mxu0 0.0
  %256 = vmatprep.subr.mxu0 0.0
  %257 = vmatpush1.msra.mxu0 %v134
  %258 = vmatprep.subr.mxu0 0.0
  %259 = vmatpush1.msra.mxu0 %v133
  %260 = vmatprep.subr.mxu0 0.0
  %261 = vmatpush1.msra.mxu0 %v132
  %262 = vmatprep.subr.mxu0 0.0
  %263 = vmatpush1.msra.mxu0 %v131
  %264 = vmatprep.subr.mxu0 0.0
  %265 = vmatpush2.msra.mxu0 0.0
  %266 = vmatprep.subr.mxu0 0.0
  %267 = vmatpush2.msra.mxu0 0.0
  %268 = vmatprep.subr.mxu0 0.0
  %269 = vmatpush2.msra.mxu0 0.0
  %270 = vmatprep.subr.mxu0 0.0
  %271 = vmatpush2.msra.mxu0 0.0
  %272 = vmatprep.subr.mxu0 0.0
  %273 = vmatpush2.msra.mxu0 0.0
  %274 = vmatprep.subr.mxu0 0.0
  %275 = vmatpush2.msra.mxu0 0.0
  %276 = vmatprep.subr.mxu0 0.0
  %277 = vmatpush2.msra.mxu0 0.0
  %278 = vmatprep.subr.mxu0 0.0
  %279 = vmatpush2.msra.mxu0 0.0
  %280 = vmatprep.subr.mxu0 0.0
  %281 = vmatpush2.msra.mxu0 0.0
  %282 = vmatprep.subr.mxu0 0.0
  %283 = vmatpush2.msra.mxu0 0.0
  %284 = vmatprep.subr.mxu0 0.0
  %285 = vmatpush2.msra.mxu0 0.0
  %286 = vmatprep.subr.mxu0 0.0
  %287 = vmatpush2.msra.mxu0 0.0
  %288 = vmatprep.subr.mxu0 0.0
  %289 = vmatpush2.msra.mxu0 0.0
  %290 = vmatprep.subr.mxu0 0.0
  %291 = vmatpush2.msra.mxu0 0.0
  %292 = vmatprep.subr.mxu0 0.0
  %293 = vmatpush2.msra.mxu0 0.0
  %294 = vmatprep.subr.mxu0 0.0
  %295 = vmatpush2.msra.mxu0 0.0
  %296 = vmatprep.mubr.f32.mxu0 0.0
  %297 = vmatmul.mubr.f32.gmra.mxu0 %v230
  %v298 = vpop.f32.mrf.mxu0
  %v299 = vadd.f32 0.0, %v298
  %v300 = vpop.f32.mrf.mxu0
  %301 = vdwg.mxu0
  %v302 = vlaneseq
  %v303 = vshrl.u32 %v302, 7
  %v304 = vsub.s32 0, %v303
  %v305 = vrot.slane %v219, %v304
  %v306 = vadd.f32 %v305, %v299
  %v307 = vxor.u32 %v306, 2147483648
  %v308 = vmul.f32 %v307, 1.442695
  %v309 = vpow.pop %v308
  %v310 = vadd.f32 %v309, 1.0
  %v311 = vrcp.pop %v310
  %v312 = vmul.f32 1.0, %v311
  %v313 = vtanh.pop %v306
  %v314 = vrot.slane %v227, 2
  %315 = vrot.lane.b32.xlu0 %v314, 32
  %v316 = vpop.permute.xlu0 %315
  %v318 = vmul.f32 %v312, %v316
  %320 = vrot.lane.b32.xlu0 %v313, 32
  %v321 = vpop.permute.xlu0 %320
  %v323 = vmul.f32 %v312, %v321
  %325 = vrot.lane.b32.xlu0 %v323, 32
  %v326 = vpop.permute.xlu0 %325
  %v328 = vadd.f32 %v318, %v326
  %v329 = vtanh.pop %v328
  %331 = vrot.lane.b32.xlu0 %v329, 32
  %v332 = vpop.permute.xlu0 %331
  %v334 = vmul.f32 %v312, %v332
  %336 = vrot.lane.b32.xlu0 %v334, 64
  %v337 = vpop.permute.xlu0 %336
  %v338 = vsel %vm228, %v337, 0
  %340 = vmatprep.subr.mxu0 0.0
  %341 = vmatpush1.msra.mxu0 0.0
  %342 = vmatprep.subr.mxu0 0.0
  %343 = vmatpush1.msra.mxu0 0.0
  %344 = vmatprep.subr.mxu0 0.0
  %345 = vmatpush1.msra.mxu0 0.0
  %346 = vmatprep.subr.mxu0 0.0
  %347 = vmatpush1.msra.mxu0 0.0
  %348 = vmatprep.subr.mxu0 0.0
  %349 = vmatpush1.msra.mxu0 0.0
  %350 = vmatprep.subr.mxu0 0.0
  %351 = vmatpush1.msra.mxu0 0.0
  %352 = vmatprep.subr.mxu0 0.0
  %353 = vmatpush1.msra.mxu0 0.0
  %354 = vmatprep.subr.mxu0 0.0
  %355 = vmatpush1.msra.mxu0 0.0
  %356 = vmatprep.subr.mxu0 0.0
  %357 = vmatpush1.msra.mxu0 0.0
  %358 = vmatprep.subr.mxu0 0.0
  %359 = vmatpush1.msra.mxu0 0.0
  %360 = vmatprep.subr.mxu0 0.0
  %361 = vmatpush1.msra.mxu0 0.0
  %362 = vmatprep.subr.mxu0 0.0
  %363 = vmatpush1.msra.mxu0 0.0
  %364 = vmatprep.subr.mxu0 0.0
  %365 = vmatpush1.msra.mxu0 %v134
  %366 = vmatprep.subr.mxu0 0.0
  %367 = vmatpush1.msra.mxu0 %v133
  %368 = vmatprep.subr.mxu0 0.0
  %369 = vmatpush1.msra.mxu0 %v132
  %370 = vmatprep.subr.mxu0 0.0
  %371 = vmatpush1.msra.mxu0 %v131
  %372 = vmatprep.subr.mxu0 0.0
  %373 = vmatpush2.msra.mxu0 0.0
  %374 = vmatprep.subr.mxu0 0.0
  %375 = vmatpush2.msra.mxu0 0.0
  %376 = vmatprep.subr.mxu0 0.0
  %377 = vmatpush2.msra.mxu0 0.0
  %378 = vmatprep.subr.mxu0 0.0
  %379 = vmatpush2.msra.mxu0 0.0
  %380 = vmatprep.subr.mxu0 0.0
  %381 = vmatpush2.msra.mxu0 0.0
  %382 = vmatprep.subr.mxu0 0.0
  %383 = vmatpush2.msra.mxu0 0.0
  %384 = vmatprep.subr.mxu0 0.0
  %385 = vmatpush2.msra.mxu0 0.0
  %386 = vmatprep.subr.mxu0 0.0
  %387 = vmatpush2.msra.mxu0 0.0
  %388 = vmatprep.subr.mxu0 0.0
  %389 = vmatpush2.msra.mxu0 0.0
  %390 = vmatprep.subr.mxu0 0.0
  %391 = vmatpush2.msra.mxu0 0.0
  %392 = vmatprep.subr.mxu0 0.0
  %393 = vmatpush2.msra.mxu0 0.0
  %394 = vmatprep.subr.mxu0 0.0
  %395 = vmatpush2.msra.mxu0 0.0
  %396 = vmatprep.subr.mxu0 0.0
  %397 = vmatpush2.msra.mxu0 0.0
  %398 = vmatprep.subr.mxu0 0.0
  %399 = vmatpush2.msra.mxu0 0.0
  %400 = vmatprep.subr.mxu0 0.0
  %401 = vmatpush2.msra.mxu0 0.0
  %402 = vmatprep.subr.mxu0 0.0
  %403 = vmatpush2.msra.mxu0 0.0
  %404 = vmatprep.mubr.f32.mxu0 0.0
  %405 = vmatmul.mubr.f32.gmra.mxu0 %v338
  %v406 = vpop.f32.mrf.mxu0
  %v407 = vadd.f32 0.0, %v406
  %v408 = vpop.f32.mrf.mxu0
  %409 = vdwg.mxu0
  %v410 = vlaneseq
  %v411 = vshrl.u32 %v410, 7
  %v412 = vsub.s32 1, %v411
  %v413 = vrot.slane %v219, %v412
  %v414 = vadd.f32 %v413, %v407
  %v415 = vxor.u32 %v414, 2147483648
  %v416 = vmul.f32 %v415, 1.442695
  %v417 = vpow.pop %v416
  %v418 = vadd.f32 %v417, 1.0
  %v419 = vrcp.pop %v418
  %v420 = vmul.f32 1.0, %v419
  %v421 = vtanh.pop %v414
  %v422 = vmul.f32 %v420, %v328
  %424 = vrot.lane.b32.xlu0 %v421, 32
  %v425 = vpop.permute.xlu0 %424
  %v427 = vmul.f32 %v420, %v425
  %429 = vrot.lane.b32.xlu0 %v427, 32
  %v430 = vpop.permute.xlu0 %429
  %v432 = vadd.f32 %v422, %v430
  %v433 = vtanh.pop %v432
  %435 = vrot.lane.b32.xlu0 %v433, 32
  %v436 = vpop.permute.xlu0 %435
  %v438 = vmul.f32 %v420, %v436
  %440 = vrot.lane.b32.xlu0 %v438, 64
  %v441 = vpop.permute.xlu0 %440
  %v442 = vsel %vm228, %v441, 0
  %444 = vmatprep.subr.mxu0 0.0
  %445 = vmatpush1.msra.mxu0 0.0
  %446 = vmatprep.subr.mxu0 0.0
  %447 = vmatpush1.msra.mxu0 0.0
  %448 = vmatprep.subr.mxu0 0.0
  %449 = vmatpush1.msra.mxu0 0.0
  %450 = vmatprep.subr.mxu0 0.0
  %451 = vmatpush1.msra.mxu0 0.0
  %452 = vmatprep.subr.mxu0 0.0
  %453 = vmatpush1.msra.mxu0 0.0
  %454 = vmatprep.subr.mxu0 0.0
  %455 = vmatpush1.msra.mxu0 0.0
  %456 = vmatprep.subr.mxu0 0.0
  %457 = vmatpush1.msra.mxu0 0.0
  %458 = vmatprep.subr.mxu0 0.0
  %459 = vmatpush1.msra.mxu0 0.0
  %460 = vmatprep.subr.mxu0 0.0
  %461 = vmatpush1.msra.mxu0 0.0
  %462 = vmatprep.subr.mxu0 0.0
  %463 = vmatpush1.msra.mxu0 0.0
  %464 = vmatprep.subr.mxu0 0.0
  %465 = vmatpush1.msra.mxu0 0.0
  %466 = vmatprep.subr.mxu0 0.0
  %467 = vmatpush1.msra.mxu0 0.0
  %468 = vmatprep.subr.mxu0 0.0
  %469 = vmatpush1.msra.mxu0 %v134
  %470 = vmatprep.subr.mxu0 0.0
  %471 = vmatpush1.msra.mxu0 %v133
  %472 = vmatprep.subr.mxu0 0.0
  %473 = vmatpush1.msra.mxu0 %v132
  %474 = vmatprep.subr.mxu0 0.0
  %475 = vmatpush1.msra.mxu0 %v131
  %476 = vmatprep.subr.mxu0 0.0
  %477 = vmatpush2.msra.mxu0 0.0
  %478 = vmatprep.subr.mxu0 0.0
  %479 = vmatpush2.msra.mxu0 0.0
  %480 = vmatprep.subr.mxu0 0.0
  %481 = vmatpush2.msra.mxu0 0.0
  %482 = vmatprep.subr.mxu0 0.0
  %483 = vmatpush2.msra.mxu0 0.0
  %484 = vmatprep.subr.mxu0 0.0
  %485 = vmatpush2.msra.mxu0 0.0
  %486 = vmatprep.subr.mxu0 0.0
  %487 = vmatpush2.msra.mxu0 0.0
  %488 = vmatprep.subr.mxu0 0.0
  %489 = vmatpush2.msra.mxu0 0.0
  %490 = vmatprep.subr.mxu0 0.0
  %491 = vmatpush2.msra.mxu0 0.0
  %492 = vmatprep.subr.mxu0 0.0
  %493 = vmatpush2.msra.mxu0 0.0
  %494 = vmatprep.subr.mxu0 0.0
  %495 = vmatpush2.msra.mxu0 0.0
  %496 = vmatprep.subr.mxu0 0.0
  %497 = vmatpush2.msra.mxu0 0.0
  %498 = vmatprep.subr.mxu0 0.0
  %499 = vmatpush2.msra.mxu0 0.0
  %500 = vmatprep.subr.mxu0 0.0
  %501 = vmatpush2.msra.mxu0 0.0
  %502 = vmatprep.subr.mxu0 0.0
  %503 = vmatpush2.msra.mxu0 0.0
  %504 = vmatprep.subr.mxu0 0.0
  %505 = vmatpush2.msra.mxu0 0.0
  %506 = vmatprep.subr.mxu0 0.0
  %507 = vmatpush2.msra.mxu0 0.0
  %508 = vmatprep.mubr.f32.mxu0 0.0
  %509 = vmatmul.mubr.f32.gmra.mxu0 %v442
  %v510 = vpop.f32.mrf.mxu0
  %v511 = vadd.f32 0.0, %v510
  %v512 = vpop.f32.mrf.mxu0
  %513 = vdwg.mxu0
  %v514 = vlaneseq
  %v515 = vshrl.u32 %v514, 7
  %v516 = vsub.s32 2, %v515
  %v517 = vrot.slane %v219, %v516
  %v518 = vadd.f32 %v517, %v511
  %v519 = vxor.u32 %v518, 2147483648
  %v520 = vmul.f32 %v519, 1.442695
  %v521 = vpow.pop %v520
  %v522 = vadd.f32 %v521, 1.0
  %v523 = vrcp.pop %v522
  %v524 = vmul.f32 1.0, %v523
  %v525 = vtanh.pop %v518
  %v526 = vmul.f32 %v524, %v432
  %528 = vrot.lane.b32.xlu0 %v525, 32
  %v529 = vpop.permute.xlu0 %528
  %v531 = vmul.f32 %v524, %v529
  %533 = vrot.lane.b32.xlu0 %v531, 32
  %v534 = vpop.permute.xlu0 %533
  %v536 = vadd.f32 %v526, %v534
  %v537 = vtanh.pop %v536
  %539 = vrot.lane.b32.xlu0 %v537, 32
  %v540 = vpop.permute.xlu0 %539
  %v542 = vmul.f32 %v524, %v540
  %544 = vrot.lane.b32.xlu0 %v542, 64
  %v545 = vpop.permute.xlu0 %544
  %v546 = vsel %vm228, %v545, 0
  %548 = vmatprep.subr.mxu0 0.0
  %549 = vmatpush1.msra.mxu0 0.0
  %550 = vmatprep.subr.mxu0 0.0
  %551 = vmatpush1.msra.mxu0 0.0
  %552 = vmatprep.subr.mxu0 0.0
  %553 = vmatpush1.msra.mxu0 0.0
  %554 = vmatprep.subr.mxu0 0.0
  %555 = vmatpush1.msra.mxu0 0.0
  %556 = vmatprep.subr.mxu0 0.0
  %557 = vmatpush1.msra.mxu0 0.0
  %558 = vmatprep.subr.mxu0 0.0
  %559 = vmatpush1.msra.mxu0 0.0
  %560 = vmatprep.subr.mxu0 0.0
  %561 = vmatpush1.msra.mxu0 0.0
  %562 = vmatprep.subr.mxu0 0.0
  %563 = vmatpush1.msra.mxu0 0.0
  %564 = vmatprep.subr.mxu0 0.0
  %565 = vmatpush1.msra.mxu0 0.0
  %566 = vmatprep.subr.mxu0 0.0
  %567 = vmatpush1.msra.mxu0 0.0
  %568 = vmatprep.subr.mxu0 0.0
  %569 = vmatpush1.msra.mxu0 0.0
  %570 = vmatprep.subr.mxu0 0.0
  %571 = vmatpush1.msra.mxu0 0.0
  %572 = vmatprep.subr.mxu0 0.0
  %573 = vmatpush1.msra.mxu0 %v134
  %574 = vmatprep.subr.mxu0 0.0
  %575 = vmatpush1.msra.mxu0 %v133
  %576 = vmatprep.subr.mxu0 0.0
  %577 = vmatpush1.msra.mxu0 %v132
  %578 = vmatprep.subr.mxu0 0.0
  %579 = vmatpush1.msra.mxu0 %v131
  %580 = vmatprep.subr.mxu0 0.0
  %581 = vmatpush2.msra.mxu0 0.0
  %582 = vmatprep.subr.mxu0 0.0
  %583 = vmatpush2.msra.mxu0 0.0
  %584 = vmatprep.subr.mxu0 0.0
  %585 = vmatpush2.msra.mxu0 0.0
  %586 = vmatprep.subr.mxu0 0.0
  %587 = vmatpush2.msra.mxu0 0.0
  %588 = vmatprep.subr.mxu0 0.0
  %589 = vmatpush2.msra.mxu0 0.0
  %590 = vmatprep.subr.mxu0 0.0
  %591 = vmatpush2.msra.mxu0 0.0
  %592 = vmatprep.subr.mxu0 0.0
  %593 = vmatpush2.msra.mxu0 0.0
  %594 = vmatprep.subr.mxu0 0.0
  %595 = vmatpush2.msra.mxu0 0.0
  %596 = vmatprep.subr.mxu0 0.0
  %597 = vmatpush2.msra.mxu0 0.0
  %598 = vmatprep.subr.mxu0 0.0
  %599 = vmatpush2.msra.mxu0 0.0
  %600 = vmatprep.subr.mxu0 0.0
  %601 = vmatpush2.msra.mxu0 0.0
  %602 = vmatprep.subr.mxu0 0.0
  %603 = vmatpush2.msra.mxu0 0.0
  %604 = vmatprep.subr.mxu0 0.0
  %605 = vmatpush2.msra.mxu0 0.0
  %606 = vmatprep.subr.mxu0 0.0
  %607 = vmatpush2.msra.mxu0 0.0
  %608 = vmatprep.subr.mxu0 0.0
  %609 = vmatpush2.msra.mxu0 0.0
  %610 = vmatprep.subr.mxu0 0.0
  %611 = vmatpush2.msra.mxu0 0.0
  %612 = vmatprep.mubr.f32.mxu0 0.0
  %613 = vmatmul.mubr.f32.gmra.mxu0 %v546
  %v614 = vpop.f32.mrf.mxu0
  %v615 = vadd.f32 0.0, %v614
  %v616 = vpop.f32.mrf.mxu0
  %617 = vdwg.mxu0
  %v618 = vlaneseq
  %v619 = vshrl.u32 %v618, 7
  %v620 = vsub.s32 3, %v619
  %v621 = vrot.slane %v219, %v620
  %v622 = vadd.f32 %v621, %v615
  %v623 = vxor.u32 %v622, 2147483648
  %v624 = vmul.f32 %v623, 1.442695
  %v625 = vpow.pop %v624
  %v626 = vadd.f32 %v625, 1.0
  %v627 = vrcp.pop %v626
  %v628 = vmul.f32 1.0, %v627
  %v629 = vtanh.pop %v622
  %v630 = vmul.f32 %v628, %v536
  %632 = vrot.lane.b32.xlu0 %v629, 32
  %v633 = vpop.permute.xlu0 %632
  %v635 = vmul.f32 %v628, %v633
  %637 = vrot.lane.b32.xlu0 %v635, 32
  %v638 = vpop.permute.xlu0 %637
  %v640 = vadd.f32 %v630, %v638
  %v641 = vtanh.pop %v640
  %643 = vrot.lane.b32.xlu0 %v641, 32
  %v644 = vpop.permute.xlu0 %643
  %v646 = vmul.f32 %v628, %v644
  %648 = vrot.lane.b32.xlu0 %v646, 64
  %v649 = vpop.permute.xlu0 %648
  %v650 = vsel %vm228, %v649, 0
  %652 = vmatprep.subr.mxu0 0.0
  %653 = vmatpush1.msra.mxu0 0.0
  %654 = vmatprep.subr.mxu0 0.0
  %655 = vmatpush1.msra.mxu0 0.0
  %656 = vmatprep.subr.mxu0 0.0
  %657 = vmatpush1.msra.mxu0 0.0
  %658 = vmatprep.subr.mxu0 0.0
  %659 = vmatpush1.msra.mxu0 0.0
  %660 = vmatprep.subr.mxu0 0.0
  %661 = vmatpush1.msra.mxu0 0.0
  %662 = vmatprep.subr.mxu0 0.0
  %663 = vmatpush1.msra.mxu0 0.0
  %664 = vmatprep.subr.mxu0 0.0
  %665 = vmatpush1.msra.mxu0 0.0
  %666 = vmatprep.subr.mxu0 0.0
  %667 = vmatpush1.msra.mxu0 0.0
  %668 = vmatprep.subr.mxu0 0.0
  %669 = vmatpush1.msra.mxu0 0.0
  %670 = vmatprep.subr.mxu0 0.0
  %671 = vmatpush1.msra.mxu0 0.0
  %672 = vmatprep.subr.mxu0 0.0
  %673 = vmatpush1.msra.mxu0 0.0
  %674 = vmatprep.subr.mxu0 0.0
  %675 = vmatpush1.msra.mxu0 0.0
  %676 = vmatprep.subr.mxu0 0.0
  %677 = vmatpush1.msra.mxu0 %v134
  %678 = vmatprep.subr.mxu0 0.0
  %679 = vmatpush1.msra.mxu0 %v133
  %680 = vmatprep.subr.mxu0 0.0
  %681 = vmatpush1.msra.mxu0 %v132
  %682 = vmatprep.subr.mxu0 0.0
  %683 = vmatpush1.msra.mxu0 %v131
  %684 = vmatprep.subr.mxu0 0.0
  %685 = vmatpush2.msra.mxu0 0.0
  %686 = vmatprep.subr.mxu0 0.0
  %687 = vmatpush2.msra.mxu0 0.0
  %688 = vmatprep.subr.mxu0 0.0
  %689 = vmatpush2.msra.mxu0 0.0
  %690 = vmatprep.subr.mxu0 0.0
  %691 = vmatpush2.msra.mxu0 0.0
  %692 = vmatprep.subr.mxu0 0.0
  %693 = vmatpush2.msra.mxu0 0.0
  %694 = vmatprep.subr.mxu0 0.0
  %695 = vmatpush2.msra.mxu0 0.0
  %696 = vmatprep.subr.mxu0 0.0
  %697 = vmatpush2.msra.mxu0 0.0
  %698 = vmatprep.subr.mxu0 0.0
  %699 = vmatpush2.msra.mxu0 0.0
  %700 = vmatprep.subr.mxu0 0.0
  %701 = vmatpush2.msra.mxu0 0.0
  %702 = vmatprep.subr.mxu0 0.0
  %703 = vmatpush2.msra.mxu0 0.0
  %704 = vmatprep.subr.mxu0 0.0
  %705 = vmatpush2.msra.mxu0 0.0
  %706 = vmatprep.subr.mxu0 0.0
  %707 = vmatpush2.msra.mxu0 0.0
  %708 = vmatprep.subr.mxu0 0.0
  %709 = vmatpush2.msra.mxu0 0.0
  %710 = vmatprep.subr.mxu0 0.0
  %711 = vmatpush2.msra.mxu0 0.0
  %712 = vmatprep.subr.mxu0 0.0
  %713 = vmatpush2.msra.mxu0 0.0
  %714 = vmatprep.subr.mxu0 0.0
  %715 = vmatpush2.msra.mxu0 0.0
  %716 = vmatprep.mubr.f32.mxu0 0.0
  %717 = vmatmul.mubr.f32.gmra.mxu0 %v650
  %v718 = vpop.f32.mrf.mxu0
  %v719 = vadd.f32 0.0, %v718
  %v720 = vpop.f32.mrf.mxu0
  %721 = vdwg.mxu0
  %v722 = vlaneseq
  %v723 = vshrl.u32 %v722, 7
  %v724 = vsub.s32 4, %v723
  %v725 = vrot.slane %v219, %v724
  %v726 = vadd.f32 %v725, %v719
  %v727 = vxor.u32 %v726, 2147483648
  %v728 = vmul.f32 %v727, 1.442695
  %v729 = vpow.pop %v728
  %v730 = vadd.f32 %v729, 1.0
  %v731 = vrcp.pop %v730
  %v732 = vmul.f32 1.0, %v731
  %v733 = vtanh.pop %v726
  %v734 = vmul.f32 %v732, %v640
  %736 = vrot.lane.b32.xlu0 %v733, 32
  %v737 = vpop.permute.xlu0 %736
  %v739 = vmul.f32 %v732, %v737
  %741 = vrot.lane.b32.xlu0 %v739, 32
  %v742 = vpop.permute.xlu0 %741
  %v744 = vadd.f32 %v734, %v742
  %v745 = vtanh.pop %v744
  %747 = vrot.lane.b32.xlu0 %v745, 32
  %v748 = vpop.permute.xlu0 %747
  %v750 = vmul.f32 %v732, %v748
  %752 = vrot.lane.b32.xlu0 %v750, 64
  %v753 = vpop.permute.xlu0 %752
  %v754 = vsel %vm228, %v753, 0
  %756 = vmatprep.subr.mxu0 0.0
  %757 = vmatpush1.msra.mxu0 0.0
  %758 = vmatprep.subr.mxu0 0.0
  %759 = vmatpush1.msra.mxu0 0.0
  %760 = vmatprep.subr.mxu0 0.0
  %761 = vmatpush1.msra.mxu0 0.0
  %762 = vmatprep.subr.mxu0 0.0
  %763 = vmatpush1.msra.mxu0 0.0
  %764 = vmatprep.subr.mxu0 0.0
  %765 = vmatpush1.msra.mxu0 0.0
  %766 = vmatprep.subr.mxu0 0.0
  %767 = vmatpush1.msra.mxu0 0.0
  %768 = vmatprep.subr.mxu0 0.0
  %769 = vmatpush1.msra.mxu0 0.0
  %770 = vmatprep.subr.mxu0 0.0
  %771 = vmatpush1.msra.mxu0 0.0
  %772 = vmatprep.subr.mxu0 0.0
  %773 = vmatpush1.msra.mxu0 0.0
  %774 = vmatprep.subr.mxu0 0.0
  %775 = vmatpush1.msra.mxu0 0.0
  %776 = vmatprep.subr.mxu0 0.0
  %777 = vmatpush1.msra.mxu0 0.0
  %778 = vmatprep.subr.mxu0 0.0
  %779 = vmatpush1.msra.mxu0 0.0
  %780 = vmatprep.subr.mxu0 0.0
  %781 = vmatpush1.msra.mxu0 %v134
  %782 = vmatprep.subr.mxu0 0.0
  %783 = vmatpush1.msra.mxu0 %v133
  %784 = vmatprep.subr.mxu0 0.0
  %785 = vmatpush1.msra.mxu0 %v132
  %786 = vmatprep.subr.mxu0 0.0
  %787 = vmatpush1.msra.mxu0 %v131
  %788 = vmatprep.subr.mxu0 0.0
  %789 = vmatpush2.msra.mxu0 0.0
  %790 = vmatprep.subr.mxu0 0.0
  %791 = vmatpush2.msra.mxu0 0.0
  %792 = vmatprep.subr.mxu0 0.0
  %793 = vmatpush2.msra.mxu0 0.0
  %794 = vmatprep.subr.mxu0 0.0
  %795 = vmatpush2.msra.mxu0 0.0
  %796 = vmatprep.subr.mxu0 0.0
  %797 = vmatpush2.msra.mxu0 0.0
  %798 = vmatprep.subr.mxu0 0.0
  %799 = vmatpush2.msra.mxu0 0.0
  %800 = vmatprep.subr.mxu0 0.0
  %801 = vmatpush2.msra.mxu0 0.0
  %802 = vmatprep.subr.mxu0 0.0
  %803 = vmatpush2.msra.mxu0 0.0
  %804 = vmatprep.subr.mxu0 0.0
  %805 = vmatpush2.msra.mxu0 0.0
  %806 = vmatprep.subr.mxu0 0.0
  %807 = vmatpush2.msra.mxu0 0.0
  %808 = vmatprep.subr.mxu0 0.0
  %809 = vmatpush2.msra.mxu0 0.0
  %810 = vmatprep.subr.mxu0 0.0
  %811 = vmatpush2.msra.mxu0 0.0
  %812 = vmatprep.subr.mxu0 0.0
  %813 = vmatpush2.msra.mxu0 0.0
  %814 = vmatprep.subr.mxu0 0.0
  %815 = vmatpush2.msra.mxu0 0.0
  %816 = vmatprep.subr.mxu0 0.0
  %817 = vmatpush2.msra.mxu0 0.0
  %818 = vmatprep.subr.mxu0 0.0
  %819 = vmatpush2.msra.mxu0 0.0
  %820 = vmatprep.mubr.f32.mxu0 0.0
  %821 = vmatmul.mubr.f32.gmra.mxu0 %v754
  %v822 = vpop.f32.mrf.mxu0
  %v823 = vadd.f32 0.0, %v822
  %v824 = vpop.f32.mrf.mxu0
  %825 = vdwg.mxu0
  %v826 = vlaneseq
  %v827 = vshrl.u32 %v826, 7
  %v828 = vsub.s32 5, %v827
  %v829 = vrot.slane %v219, %v828
  %v830 = vadd.f32 %v829, %v823
  %v831 = vxor.u32 %v830, 2147483648
  %v832 = vmul.f32 %v831, 1.442695
  %v833 = vpow.pop %v832
  %v834 = vadd.f32 %v833, 1.0
  %v835 = vrcp.pop %v834
  %v836 = vmul.f32 1.0, %v835
  %v837 = vtanh.pop %v830
  %v838 = vmul.f32 %v836, %v744
  %840 = vrot.lane.b32.xlu0 %v837, 32
  %v841 = vpop.permute.xlu0 %840
  %v843 = vmul.f32 %v836, %v841
  %845 = vrot.lane.b32.xlu0 %v843, 32
  %v846 = vpop.permute.xlu0 %845
  %v848 = vadd.f32 %v838, %v846
  %v849 = vtanh.pop %v848
  %851 = vrot.lane.b32.xlu0 %v849, 32
  %v852 = vpop.permute.xlu0 %851
  %v854 = vmul.f32 %v836, %v852
  %856 = vrot.lane.b32.xlu0 %v854, 64
  %v857 = vpop.permute.xlu0 %856
  %v858 = vsel %vm228, %v857, 0
  %860 = vmatprep.subr.mxu0 0.0
  %861 = vmatpush1.msra.mxu0 0.0
  %862 = vmatprep.subr.mxu0 0.0
  %863 = vmatpush1.msra.mxu0 0.0
  %864 = vmatprep.subr.mxu0 0.0
  %865 = vmatpush1.msra.mxu0 0.0
  %866 = vmatprep.subr.mxu0 0.0
  %867 = vmatpush1.msra.mxu0 0.0
  %868 = vmatprep.subr.mxu0 0.0
  %869 = vmatpush1.msra.mxu0 0.0
  %870 = vmatprep.subr.mxu0 0.0
  %871 = vmatpush1.msra.mxu0 0.0
  %872 = vmatprep.subr.mxu0 0.0
  %873 = vmatpush1.msra.mxu0 0.0
  %874 = vmatprep.subr.mxu0 0.0
  %875 = vmatpush1.msra.mxu0 0.0
  %876 = vmatprep.subr.mxu0 0.0
  %877 = vmatpush1.msra.mxu0 0.0
  %878 = vmatprep.subr.mxu0 0.0
  %879 = vmatpush1.msra.mxu0 0.0
  %880 = vmatprep.subr.mxu0 0.0
  %881 = vmatpush1.msra.mxu0 0.0
  %882 = vmatprep.subr.mxu0 0.0
  %883 = vmatpush1.msra.mxu0 0.0
  %884 = vmatprep.subr.mxu0 0.0
  %885 = vmatpush1.msra.mxu0 %v134
  %886 = vmatprep.subr.mxu0 0.0
  %887 = vmatpush1.msra.mxu0 %v133
  %888 = vmatprep.subr.mxu0 0.0
  %889 = vmatpush1.msra.mxu0 %v132
  %890 = vmatprep.subr.mxu0 0.0
  %891 = vmatpush1.msra.mxu0 %v131
  %892 = vmatprep.subr.mxu0 0.0
  %893 = vmatpush2.msra.mxu0 0.0
  %894 = vmatprep.subr.mxu0 0.0
  %895 = vmatpush2.msra.mxu0 0.0
  %896 = vmatprep.subr.mxu0 0.0
  %897 = vmatpush2.msra.mxu0 0.0
  %898 = vmatprep.subr.mxu0 0.0
  %899 = vmatpush2.msra.mxu0 0.0
  %900 = vmatprep.subr.mxu0 0.0
  %901 = vmatpush2.msra.mxu0 0.0
  %902 = vmatprep.subr.mxu0 0.0
  %903 = vmatpush2.msra.mxu0 0.0
  %904 = vmatprep.subr.mxu0 0.0
  %905 = vmatpush2.msra.mxu0 0.0
  %906 = vmatprep.subr.mxu0 0.0
  %907 = vmatpush2.msra.mxu0 0.0
  %908 = vmatprep.subr.mxu0 0.0
  %909 = vmatpush2.msra.mxu0 0.0
  %910 = vmatprep.subr.mxu0 0.0
  %911 = vmatpush2.msra.mxu0 0.0
  %912 = vmatprep.subr.mxu0 0.0
  %913 = vmatpush2.msra.mxu0 0.0
  %914 = vmatprep.subr.mxu0 0.0
  %915 = vmatpush2.msra.mxu0 0.0
  %916 = vmatprep.subr.mxu0 0.0
  %917 = vmatpush2.msra.mxu0 0.0
  %918 = vmatprep.subr.mxu0 0.0
  %919 = vmatpush2.msra.mxu0 0.0
  %920 = vmatprep.subr.mxu0 0.0
  %921 = vmatpush2.msra.mxu0 0.0
  %922 = vmatprep.subr.mxu0 0.0
  %923 = vmatpush2.msra.mxu0 0.0
  %924 = vmatprep.mubr.f32.mxu0 0.0
  %925 = vmatmul.mubr.f32.gmra.mxu0 %v858
  %v926 = vpop.f32.mrf.mxu0
  %v927 = vadd.f32 0.0, %v926
  %v928 = vpop.f32.mrf.mxu0
  %929 = vdwg.mxu0
  %v930 = vlaneseq
  %v931 = vshrl.u32 %v930, 7
  %v932 = vsub.s32 6, %v931
  %v933 = vrot.slane %v219, %v932
  %v934 = vadd.f32 %v933, %v927
  %v935 = vxor.u32 %v934, 2147483648
  %v936 = vmul.f32 %v935, 1.442695
  %v937 = vpow.pop %v936
  %v938 = vadd.f32 %v937, 1.0
  %v939 = vrcp.pop %v938
  %v940 = vmul.f32 1.0, %v939
  %v941 = vtanh.pop %v934
  %v942 = vmul.f32 %v940, %v848
  %944 = vrot.lane.b32.xlu0 %v941, 32
  %v945 = vpop.permute.xlu0 %944
  %v947 = vmul.f32 %v940, %v945
  %949 = vrot.lane.b32.xlu0 %v947, 32
  %v950 = vpop.permute.xlu0 %949
  %v952 = vadd.f32 %v942, %v950
  %v953 = vtanh.pop %v952
  %955 = vrot.lane.b32.xlu0 %v953, 32
  %v956 = vpop.permute.xlu0 %955
  %v958 = vmul.f32 %v940, %v956
  %960 = vrot.lane.b32.xlu0 %v958, 64
  %v961 = vpop.permute.xlu0 %960
  %v962 = vsel %vm228, %v961, 0
  %964 = vmatprep.subr.mxu0 0.0
  %965 = vmatpush1.msra.mxu0 0.0
  %966 = vmatprep.subr.mxu0 0.0
  %967 = vmatpush1.msra.mxu0 0.0
  %968 = vmatprep.subr.mxu0 0.0
  %969 = vmatpush1.msra.mxu0 0.0
  %970 = vmatprep.subr.mxu0 0.0
  %971 = vmatpush1.msra.mxu0 0.0
  %972 = vmatprep.subr.mxu0 0.0
  %973 = vmatpush1.msra.mxu0 0.0
  %974 = vmatprep.subr.mxu0 0.0
  %975 = vmatpush1.msra.mxu0 0.0
  %976 = vmatprep.subr.mxu0 0.0
  %977 = vmatpush1.msra.mxu0 0.0
  %978 = vmatprep.subr.mxu0 0.0
  %979 = vmatpush1.msra.mxu0 0.0
  %980 = vmatprep.subr.mxu0 0.0
  %981 = vmatpush1.msra.mxu0 0.0
  %982 = vmatprep.subr.mxu0 0.0
  %983 = vmatpush1.msra.mxu0 0.0
  %984 = vmatprep.subr.mxu0 0.0
  %985 = vmatpush1.msra.mxu0 0.0
  %986 = vmatprep.subr.mxu0 0.0
  %987 = vmatpush1.msra.mxu0 0.0
  %988 = vmatprep.subr.mxu0 0.0
  %989 = vmatpush1.msra.mxu0 %v134
  %990 = vmatprep.subr.mxu0 0.0
  %991 = vmatpush1.msra.mxu0 %v133
  %992 = vmatprep.subr.mxu0 0.0
  %993 = vmatpush1.msra.mxu0 %v132
  %994 = vmatprep.subr.mxu0 0.0
  %995 = vmatpush1.msra.mxu0 %v131
  %996 = vmatprep.subr.mxu0 0.0
  %997 = vmatpush2.msra.mxu0 0.0
  %998 = vmatprep.subr.mxu0 0.0
  %999 = vmatpush2.msra.mxu0 0.0
  %1000 = vmatprep.subr.mxu0 0.0
  %1001 = vmatpush2.msra.mxu0 0.0
  %1002 = vmatprep.subr.mxu0 0.0
  %1003 = vmatpush2.msra.mxu0 0.0
  %1004 = vmatprep.subr.mxu0 0.0
  %1005 = vmatpush2.msra.mxu0 0.0
  %1006 = vmatprep.subr.mxu0 0.0
  %1007 = vmatpush2.msra.mxu0 0.0
  %1008 = vmatprep.subr.mxu0 0.0
  %1009 = vmatpush2.msra.mxu0 0.0
  %1010 = vmatprep.subr.mxu0 0.0
  %1011 = vmatpush2.msra.mxu0 0.0
  %1012 = vmatprep.subr.mxu0 0.0
  %1013 = vmatpush2.msra.mxu0 0.0
  %1014 = vmatprep.subr.mxu0 0.0
  %1015 = vmatpush2.msra.mxu0 0.0
  %1016 = vmatprep.subr.mxu0 0.0
  %1017 = vmatpush2.msra.mxu0 0.0
  %1018 = vmatprep.subr.mxu0 0.0
  %1019 = vmatpush2.msra.mxu0 0.0
  %1020 = vmatprep.subr.mxu0 0.0
  %1021 = vmatpush2.msra.mxu0 0.0
  %1022 = vmatprep.subr.mxu0 0.0
  %1023 = vmatpush2.msra.mxu0 0.0
  %1024 = vmatprep.subr.mxu0 0.0
  %1025 = vmatpush2.msra.mxu0 0.0
  %1026 = vmatprep.subr.mxu0 0.0
  %1027 = vmatpush2.msra.mxu0 0.0
  %1028 = vmatprep.mubr.f32.mxu0 0.0
  %1029 = vmatmul.mubr.f32.gmra.mxu0 %v962
  %v1030 = vpop.f32.mrf.mxu0
  %v1031 = vadd.f32 0.0, %v1030
  %v1032 = vpop.f32.mrf.mxu0
  %1033 = vdwg.mxu0
  %v1034 = vlaneseq
  %v1035 = vshrl.u32 %v1034, 7
  %v1036 = vsub.s32 7, %v1035
  %v1037 = vrot.slane %v219, %v1036
  %v1038 = vadd.f32 %v1037, %v1031
  %v1039 = vxor.u32 %v1038, 2147483648
  %v1040 = vmul.f32 %v1039, 1.442695
  %v1041 = vpow.pop %v1040
  %v1042 = vadd.f32 %v1041, 1.0
  %v1043 = vrcp.pop %v1042
  %v1044 = vmul.f32 1.0, %v1043
  %v1045 = vtanh.pop %v1038
  %v1046 = vmul.f32 %v1044, %v952
  %1048 = vrot.lane.b32.xlu0 %v1045, 32
  %v1049 = vpop.permute.xlu0 %1048
  %v1051 = vmul.f32 %v1044, %v1049
  %1053 = vrot.lane.b32.xlu0 %v1051, 32
  %v1054 = vpop.permute.xlu0 %1053
  %v1056 = vadd.f32 %v1046, %v1054
  %v1057 = vtanh.pop %v1056
  %1059 = vrot.lane.b32.xlu0 %v1057, 32
  %v1060 = vpop.permute.xlu0 %1059
  %v1062 = vmul.f32 %v1044, %v1060
  %v1063 = vlaneseq
  %v1064 = vshrl.u32 %v1063, 7
  %v1065 = vsub.s32 0, %v1064
  %v1066 = vrot.slane %v140, %v1065
  %1068 = vrot.lane.b32.xlu0 %v1062, 64
  %v1069 = vpop.permute.xlu0 %1068
  %v1070 = vsel %vm228, %v1069, 0
  %1072 = vmatprep.subr.mxu0 0.0
  %1073 = vmatpush1.msra.mxu0 0.0
  %1074 = vmatprep.subr.mxu0 0.0
  %1075 = vmatpush1.msra.mxu0 0.0
  %1076 = vmatprep.subr.mxu0 0.0
  %1077 = vmatpush1.msra.mxu0 0.0
  %1078 = vmatprep.subr.mxu0 0.0
  %1079 = vmatpush1.msra.mxu0 0.0
  %1080 = vmatprep.subr.mxu0 0.0
  %1081 = vmatpush1.msra.mxu0 0.0
  %1082 = vmatprep.subr.mxu0 0.0
  %1083 = vmatpush1.msra.mxu0 0.0
  %1084 = vmatprep.subr.mxu0 0.0
  %1085 = vmatpush1.msra.mxu0 0.0
  %1086 = vmatprep.subr.mxu0 0.0
  %1087 = vmatpush1.msra.mxu0 0.0
  %1088 = vmatprep.subr.mxu0 0.0
  %1089 = vmatpush1.msra.mxu0 0.0
  %1090 = vmatprep.subr.mxu0 0.0
  %1091 = vmatpush1.msra.mxu0 0.0
  %1092 = vmatprep.subr.mxu0 0.0
  %1093 = vmatpush1.msra.mxu0 0.0
  %1094 = vmatprep.subr.mxu0 0.0
  %1095 = vmatpush1.msra.mxu0 0.0
  %1096 = vmatprep.subr.mxu0 0.0
  %1097 = vmatpush1.msra.mxu0 %v139
  %1098 = vmatprep.subr.mxu0 0.0
  %1099 = vmatpush1.msra.mxu0 %v138
  %1100 = vmatprep.subr.mxu0 0.0
  %1101 = vmatpush1.msra.mxu0 %v137
  %1102 = vmatprep.subr.mxu0 0.0
  %1103 = vmatpush1.msra.mxu0 %v136
  %1104 = vmatprep.subr.mxu0 0.0
  %1105 = vmatpush2.msra.mxu0 0.0
  %1106 = vmatprep.subr.mxu0 0.0
  %1107 = vmatpush2.msra.mxu0 0.0
  %1108 = vmatprep.subr.mxu0 0.0
  %1109 = vmatpush2.msra.mxu0 0.0
  %1110 = vmatprep.subr.mxu0 0.0
  %1111 = vmatpush2.msra.mxu0 0.0
  %1112 = vmatprep.subr.mxu0 0.0
  %1113 = vmatpush2.msra.mxu0 0.0
  %1114 = vmatprep.subr.mxu0 0.0
  %1115 = vmatpush2.msra.mxu0 0.0
  %1116 = vmatprep.subr.mxu0 0.0
  %1117 = vmatpush2.msra.mxu0 0.0
  %1118 = vmatprep.subr.mxu0 0.0
  %1119 = vmatpush2.msra.mxu0 0.0
  %1120 = vmatprep.subr.mxu0 0.0
  %1121 = vmatpush2.msra.mxu0 0.0
  %1122 = vmatprep.subr.mxu0 0.0
  %1123 = vmatpush2.msra.mxu0 0.0
  %1124 = vmatprep.subr.mxu0 0.0
  %1125 = vmatpush2.msra.mxu0 0.0
  %1126 = vmatprep.subr.mxu0 0.0
  %1127 = vmatpush2.msra.mxu0 0.0
  %1128 = vmatprep.subr.mxu0 0.0
  %1129 = vmatpush2.msra.mxu0 0.0
  %1130 = vmatprep.subr.mxu0 0.0
  %1131 = vmatpush2.msra.mxu0 0.0
  %1132 = vmatprep.subr.mxu0 0.0
  %1133 = vmatpush2.msra.mxu0 0.0
  %1134 = vmatprep.subr.mxu0 0.0
  %1135 = vmatpush2.msra.mxu0 0.0
  %1136 = vmatprep.mubr.f32.mxu0 0.0
  %1137 = vmatmul.mubr.f32.gmra.mxu0 %v1070
  %v1138 = vpop.f32.mrf.mxu0
  %v1139 = vadd.f32 %v1066, %v1138
  %v1140 = vpop.f32.mrf.mxu0
  %1141 = vdwg.mxu0
  %1142 = vmatprep.subr.mxu0 0.0
  %1143 = vmatpush1.msra.mxu0 0.0
  %1144 = vmatprep.subr.mxu0 0.0
  %1145 = vmatpush1.msra.mxu0 0.0
  %1146 = vmatprep.subr.mxu0 0.0
  %1147 = vmatpush1.msra.mxu0 0.0
  %1148 = vmatprep.subr.mxu0 0.0
  %1149 = vmatpush1.msra.mxu0 0.0
  %1150 = vmatprep.subr.mxu0 0.0
  %1151 = vmatpush1.msra.mxu0 0.0
  %1152 = vmatprep.subr.mxu0 0.0
  %1153 = vmatpush1.msra.mxu0 0.0
  %1154 = vmatprep.subr.mxu0 0.0
  %1155 = vmatpush1.msra.mxu0 0.0
  %1156 = vmatprep.subr.mxu0 0.0
  %1157 = vmatpush1.msra.mxu0 0.0
  %1158 = vmatprep.subr.mxu0 0.0
  %1159 = vmatpush1.msra.mxu0 0.0
  %1160 = vmatprep.subr.mxu0 0.0
  %1161 = vmatpush1.msra.mxu0 0.0
  %1162 = vmatprep.subr.mxu0 0.0
  %1163 = vmatpush1.msra.mxu0 0.0
  %1164 = vmatprep.subr.mxu0 0.0
  %1165 = vmatpush1.msra.mxu0 0.0
  %1166 = vmatprep.subr.mxu0 0.0
  %1167 = vmatpush1.msra.mxu0 %v134
  %1168 = vmatprep.subr.mxu0 0.0
  %1169 = vmatpush1.msra.mxu0 %v133
  %1170 = vmatprep.subr.mxu0 0.0
  %1171 = vmatpush1.msra.mxu0 %v132
  %1172 = vmatprep.subr.mxu0 0.0
  %1173 = vmatpush1.msra.mxu0 %v131
  %1174 = vmatprep.subr.mxu0 0.0
  %1175 = vmatpush2.msra.mxu0 0.0
  %1176 = vmatprep.subr.mxu0 0.0
  %1177 = vmatpush2.msra.mxu0 0.0
  %1178 = vmatprep.subr.mxu0 0.0
  %1179 = vmatpush2.msra.mxu0 0.0
  %1180 = vmatprep.subr.mxu0 0.0
  %1181 = vmatpush2.msra.mxu0 0.0
  %1182 = vmatprep.subr.mxu0 0.0
  %1183 = vmatpush2.msra.mxu0 0.0
  %1184 = vmatprep.subr.mxu0 0.0
  %1185 = vmatpush2.msra.mxu0 0.0
  %1186 = vmatprep.subr.mxu0 0.0
  %1187 = vmatpush2.msra.mxu0 0.0
  %1188 = vmatprep.subr.mxu0 0.0
  %1189 = vmatpush2.msra.mxu0 0.0
  %1190 = vmatprep.subr.mxu0 0.0
  %1191 = vmatpush2.msra.mxu0 0.0
  %1192 = vmatprep.subr.mxu0 0.0
  %1193 = vmatpush2.msra.mxu0 0.0
  %1194 = vmatprep.subr.mxu0 0.0
  %1195 = vmatpush2.msra.mxu0 0.0
  %1196 = vmatprep.subr.mxu0 0.0
  %1197 = vmatpush2.msra.mxu0 0.0
  %1198 = vmatprep.subr.mxu0 0.0
  %1199 = vmatpush2.msra.mxu0 0.0
  %1200 = vmatprep.subr.mxu0 0.0
  %1201 = vmatpush2.msra.mxu0 0.0
  %1202 = vmatprep.subr.mxu0 0.0
  %1203 = vmatpush2.msra.mxu0 0.0
  %1204 = vmatprep.subr.mxu0 0.0
  %1205 = vmatpush2.msra.mxu0 0.0
  %1206 = vmatprep.mubr.f32.mxu0 0.0
  %1207 = vmatmul.mubr.f32.gmra.mxu0 %v1070
  %v1208 = vpop.f32.mrf.mxu0
  %v1209 = vadd.f32 0.0, %v1208
  %v1210 = vpop.f32.mrf.mxu0
  %1211 = vdwg.mxu0
  %v1212 = vlaneseq
  %v1213 = vshrl.u32 %v1212, 7
  %v1214 = vsub.s32 0, %v1213
  %v1215 = vrot.slane %v224, %v1214
  %v1216 = vadd.f32 %v1215, %v1209
  %v1217 = vxor.u32 %v1216, 2147483648
  %v1218 = vmul.f32 %v1217, 1.442695
  %v1219 = vpow.pop %v1218
  %v1220 = vadd.f32 %v1219, 1.0
  %v1221 = vrcp.pop %v1220
  %v1222 = vmul.f32 1.0, %v1221
  %v1223 = vtanh.pop %v1216
  %v1224 = vmul.f32 %v1222, %v1056
  %1226 = vrot.lane.b32.xlu0 %v1223, 32
  %v1227 = vpop.permute.xlu0 %1226
  %v1229 = vmul.f32 %v1222, %v1227
  %1231 = vrot.lane.b32.xlu0 %v1229, 32
  %v1232 = vpop.permute.xlu0 %1231
  %v1234 = vadd.f32 %v1224, %v1232
  %v1235 = vtanh.pop %v1234
  %1237 = vrot.lane.b32.xlu0 %v1235, 32
  %v1238 = vpop.permute.xlu0 %1237
  %v1240 = vmul.f32 %v1222, %v1238
  %1242 = vrot.lane.b32.xlu0 %v1240, 64
  %v1243 = vpop.permute.xlu0 %1242
  %v1244 = vsel %vm228, %v1243, 0
  %1246 = vmatprep.subr.mxu0 0.0
  %1247 = vmatpush1.msra.mxu0 0.0
  %1248 = vmatprep.subr.mxu0 0.0
  %1249 = vmatpush1.msra.mxu0 0.0
  %1250 = vmatprep.subr.mxu0 0.0
  %1251 = vmatpush1.msra.mxu0 0.0
  %1252 = vmatprep.subr.mxu0 0.0
  %1253 = vmatpush1.msra.mxu0 0.0
  %1254 = vmatprep.subr.mxu0 0.0
  %1255 = vmatpush1.msra.mxu0 0.0
  %1256 = vmatprep.subr.mxu0 0.0
  %1257 = vmatpush1.msra.mxu0 0.0
  %1258 = vmatprep.subr.mxu0 0.0
  %1259 = vmatpush1.msra.mxu0 0.0
  %1260 = vmatprep.subr.mxu0 0.0
  %1261 = vmatpush1.msra.mxu0 0.0
  %1262 = vmatprep.subr.mxu0 0.0
  %1263 = vmatpush1.msra.mxu0 0.0
  %1264 = vmatprep.subr.mxu0 0.0
  %1265 = vmatpush1.msra.mxu0 0.0
  %1266 = vmatprep.subr.mxu0 0.0
  %1267 = vmatpush1.msra.mxu0 0.0
  %1268 = vmatprep.subr.mxu0 0.0
  %1269 = vmatpush1.msra.mxu0 0.0
  %1270 = vmatprep.subr.mxu0 0.0
  %1271 = vmatpush1.msra.mxu0 %v134
  %1272 = vmatprep.subr.mxu0 0.0
  %1273 = vmatpush1.msra.mxu0 %v133
  %1274 = vmatprep.subr.mxu0 0.0
  %1275 = vmatpush1.msra.mxu0 %v132
  %1276 = vmatprep.subr.mxu0 0.0
  %1277 = vmatpush1.msra.mxu0 %v131
  %1278 = vmatprep.subr.mxu0 0.0
  %1279 = vmatpush2.msra.mxu0 0.0
  %1280 = vmatprep.subr.mxu0 0.0
  %1281 = vmatpush2.msra.mxu0 0.0
  %1282 = vmatprep.subr.mxu0 0.0
  %1283 = vmatpush2.msra.mxu0 0.0
  %1284 = vmatprep.subr.mxu0 0.0
  %1285 = vmatpush2.msra.mxu0 0.0
  %1286 = vmatprep.subr.mxu0 0.0
  %1287 = vmatpush2.msra.mxu0 0.0
  %1288 = vmatprep.subr.mxu0 0.0
  %1289 = vmatpush2.msra.mxu0 0.0
  %1290 = vmatprep.subr.mxu0 0.0
  %1291 = vmatpush2.msra.mxu0 0.0
  %1292 = vmatprep.subr.mxu0 0.0
  %1293 = vmatpush2.msra.mxu0 0.0
  %1294 = vmatprep.subr.mxu0 0.0
  %1295 = vmatpush2.msra.mxu0 0.0
  %1296 = vmatprep.subr.mxu0 0.0
  %1297 = vmatpush2.msra.mxu0 0.0
  %1298 = vmatprep.subr.mxu0 0.0
  %1299 = vmatpush2.msra.mxu0 0.0
  %1300 = vmatprep.subr.mxu0 0.0
  %1301 = vmatpush2.msra.mxu0 0.0
  %1302 = vmatprep.subr.mxu0 0.0
  %1303 = vmatpush2.msra.mxu0 0.0
  %1304 = vmatprep.subr.mxu0 0.0
  %1305 = vmatpush2.msra.mxu0 0.0
  %1306 = vmatprep.subr.mxu0 0.0
  %1307 = vmatpush2.msra.mxu0 0.0
  %1308 = vmatprep.subr.mxu0 0.0
  %1309 = vmatpush2.msra.mxu0 0.0
  %1310 = vmatprep.mubr.f32.mxu0 0.0
  %1311 = vmatmul.mubr.f32.gmra.mxu0 %v1244
  %v1312 = vpop.f32.mrf.mxu0
  %v1313 = vadd.f32 0.0, %v1312
  %v1314 = vpop.f32.mrf.mxu0
  %1315 = vdwg.mxu0
  %v1316 = vlaneseq
  %v1317 = vshrl.u32 %v1316, 7
  %v1318 = vsub.s32 1, %v1317
  %v1319 = vrot.slane %v224, %v1318
  %v1320 = vadd.f32 %v1319, %v1313
  %v1321 = vxor.u32 %v1320, 2147483648
  %v1322 = vmul.f32 %v1321, 1.442695
  %v1323 = vpow.pop %v1322
  %v1324 = vadd.f32 %v1323, 1.0
  %v1325 = vrcp.pop %v1324
  %v1326 = vmul.f32 1.0, %v1325
  %v1327 = vtanh.pop %v1320
  %v1328 = vmul.f32 %v1326, %v1234
  %1330 = vrot.lane.b32.xlu0 %v1327, 32
  %v1331 = vpop.permute.xlu0 %1330
  %v1333 = vmul.f32 %v1326, %v1331
  %1335 = vrot.lane.b32.xlu0 %v1333, 32
  %v1336 = vpop.permute.xlu0 %1335
  %v1338 = vadd.f32 %v1328, %v1336
  %v1339 = vtanh.pop %v1338
  %1341 = vrot.lane.b32.xlu0 %v1339, 32
  %v1342 = vpop.permute.xlu0 %1341
  %v1344 = vmul.f32 %v1326, %v1342
  %1346 = vrot.lane.b32.xlu0 %v1344, 64
  %v1347 = vpop.permute.xlu0 %1346
  %v1348 = vsel %vm228, %v1347, 0
  %1350 = vmatprep.subr.mxu0 0.0
  %1351 = vmatpush1.msra.mxu0 0.0
  %1352 = vmatprep.subr.mxu0 0.0
  %1353 = vmatpush1.msra.mxu0 0.0
  %1354 = vmatprep.subr.mxu0 0.0
  %1355 = vmatpush1.msra.mxu0 0.0
  %1356 = vmatprep.subr.mxu0 0.0
  %1357 = vmatpush1.msra.mxu0 0.0
  %1358 = vmatprep.subr.mxu0 0.0
  %1359 = vmatpush1.msra.mxu0 0.0
  %1360 = vmatprep.subr.mxu0 0.0
  %1361 = vmatpush1.msra.mxu0 0.0
  %1362 = vmatprep.subr.mxu0 0.0
  %1363 = vmatpush1.msra.mxu0 0.0
  %1364 = vmatprep.subr.mxu0 0.0
  %1365 = vmatpush1.msra.mxu0 0.0
  %1366 = vmatprep.subr.mxu0 0.0
  %1367 = vmatpush1.msra.mxu0 0.0
  %1368 = vmatprep.subr.mxu0 0.0
  %1369 = vmatpush1.msra.mxu0 0.0
  %1370 = vmatprep.subr.mxu0 0.0
  %1371 = vmatpush1.msra.mxu0 0.0
  %1372 = vmatprep.subr.mxu0 0.0
  %1373 = vmatpush1.msra.mxu0 0.0
  %1374 = vmatprep.subr.mxu0 0.0
  %1375 = vmatpush1.msra.mxu0 %v134
  %1376 = vmatprep.subr.mxu0 0.0
  %1377 = vmatpush1.msra.mxu0 %v133
  %1378 = vmatprep.subr.mxu0 0.0
  %1379 = vmatpush1.msra.mxu0 %v132
  %1380 = vmatprep.subr.mxu0 0.0
  %1381 = vmatpush1.msra.mxu0 %v131
  %1382 = vmatprep.subr.mxu0 0.0
  %1383 = vmatpush2.msra.mxu0 0.0
  %1384 = vmatprep.subr.mxu0 0.0
  %1385 = vmatpush2.msra.mxu0 0.0
  %1386 = vmatprep.subr.mxu0 0.0
  %1387 = vmatpush2.msra.mxu0 0.0
  %1388 = vmatprep.subr.mxu0 0.0
  %1389 = vmatpush2.msra.mxu0 0.0
  %1390 = vmatprep.subr.mxu0 0.0
  %1391 = vmatpush2.msra.mxu0 0.0
  %1392 = vmatprep.subr.mxu0 0.0
  %1393 = vmatpush2.msra.mxu0 0.0
  %1394 = vmatprep.subr.mxu0 0.0
  %1395 = vmatpush2.msra.mxu0 0.0
  %1396 = vmatprep.subr.mxu0 0.0
  %1397 = vmatpush2.msra.mxu0 0.0
  %1398 = vmatprep.subr.mxu0 0.0
  %1399 = vmatpush2.msra.mxu0 0.0
  %1400 = vmatprep.subr.mxu0 0.0
  %1401 = vmatpush2.msra.mxu0 0.0
  %1402 = vmatprep.subr.mxu0 0.0
  %1403 = vmatpush2.msra.mxu0 0.0
  %1404 = vmatprep.subr.mxu0 0.0
  %1405 = vmatpush2.msra.mxu0 0.0
  %1406 = vmatprep.subr.mxu0 0.0
  %1407 = vmatpush2.msra.mxu0 0.0
  %1408 = vmatprep.subr.mxu0 0.0
  %1409 = vmatpush2.msra.mxu0 0.0
  %1410 = vmatprep.subr.mxu0 0.0
  %1411 = vmatpush2.msra.mxu0 0.0
  %1412 = vmatprep.subr.mxu0 0.0
  %1413 = vmatpush2.msra.mxu0 0.0
  %1414 = vmatprep.mubr.f32.mxu0 0.0
  %1415 = vmatmul.mubr.f32.gmra.mxu0 %v1348
  %v1416 = vpop.f32.mrf.mxu0
  %v1417 = vadd.f32 0.0, %v1416
  %v1418 = vpop.f32.mrf.mxu0
  %1419 = vdwg.mxu0
  %v1420 = vlaneseq
  %v1421 = vshrl.u32 %v1420, 7
  %v1422 = vsub.s32 2, %v1421
  %v1423 = vrot.slane %v224, %v1422
  %v1424 = vadd.f32 %v1423, %v1417
  %v1425 = vxor.u32 %v1424, 2147483648
  %v1426 = vmul.f32 %v1425, 1.442695
  %v1427 = vpow.pop %v1426
  %v1428 = vadd.f32 %v1427, 1.0
  %v1429 = vrcp.pop %v1428
  %v1430 = vmul.f32 1.0, %v1429
  %v1431 = vtanh.pop %v1424
  %v1432 = vmul.f32 %v1430, %v1338
  %1434 = vrot.lane.b32.xlu0 %v1431, 32
  %v1435 = vpop.permute.xlu0 %1434
  %v1437 = vmul.f32 %v1430, %v1435
  %1439 = vrot.lane.b32.xlu0 %v1437, 32
  %v1440 = vpop.permute.xlu0 %1439
  %v1442 = vadd.f32 %v1432, %v1440
  %v1443 = vtanh.pop %v1442
  %1445 = vrot.lane.b32.xlu0 %v1443, 32
  %v1446 = vpop.permute.xlu0 %1445
  %v1448 = vmul.f32 %v1430, %v1446
  %1450 = vrot.lane.b32.xlu0 %v1448, 64
  %v1451 = vpop.permute.xlu0 %1450
  %v1452 = vsel %vm228, %v1451, 0
  %1454 = vmatprep.subr.mxu0 0.0
  %1455 = vmatpush1.msra.mxu0 0.0
  %1456 = vmatprep.subr.mxu0 0.0
  %1457 = vmatpush1.msra.mxu0 0.0
  %1458 = vmatprep.subr.mxu0 0.0
  %1459 = vmatpush1.msra.mxu0 0.0
  %1460 = vmatprep.subr.mxu0 0.0
  %1461 = vmatpush1.msra.mxu0 0.0
  %1462 = vmatprep.subr.mxu0 0.0
  %1463 = vmatpush1.msra.mxu0 0.0
  %1464 = vmatprep.subr.mxu0 0.0
  %1465 = vmatpush1.msra.mxu0 0.0
  %1466 = vmatprep.subr.mxu0 0.0
  %1467 = vmatpush1.msra.mxu0 0.0
  %1468 = vmatprep.subr.mxu0 0.0
  %1469 = vmatpush1.msra.mxu0 0.0
  %1470 = vmatprep.subr.mxu0 0.0
  %1471 = vmatpush1.msra.mxu0 0.0
  %1472 = vmatprep.subr.mxu0 0.0
  %1473 = vmatpush1.msra.mxu0 0.0
  %1474 = vmatprep.subr.mxu0 0.0
  %1475 = vmatpush1.msra.mxu0 0.0
  %1476 = vmatprep.subr.mxu0 0.0
  %1477 = vmatpush1.msra.mxu0 0.0
  %1478 = vmatprep.subr.mxu0 0.0
  %1479 = vmatpush1.msra.mxu0 %v134
  %1480 = vmatprep.subr.mxu0 0.0
  %1481 = vmatpush1.msra.mxu0 %v133
  %1482 = vmatprep.subr.mxu0 0.0
  %1483 = vmatpush1.msra.mxu0 %v132
  %1484 = vmatprep.subr.mxu0 0.0
  %1485 = vmatpush1.msra.mxu0 %v131
  %1486 = vmatprep.subr.mxu0 0.0
  %1487 = vmatpush2.msra.mxu0 0.0
  %1488 = vmatprep.subr.mxu0 0.0
  %1489 = vmatpush2.msra.mxu0 0.0
  %1490 = vmatprep.subr.mxu0 0.0
  %1491 = vmatpush2.msra.mxu0 0.0
  %1492 = vmatprep.subr.mxu0 0.0
  %1493 = vmatpush2.msra.mxu0 0.0
  %1494 = vmatprep.subr.mxu0 0.0
  %1495 = vmatpush2.msra.mxu0 0.0
  %1496 = vmatprep.subr.mxu0 0.0
  %1497 = vmatpush2.msra.mxu0 0.0
  %1498 = vmatprep.subr.mxu0 0.0
  %1499 = vmatpush2.msra.mxu0 0.0
  %1500 = vmatprep.subr.mxu0 0.0
  %1501 = vmatpush2.msra.mxu0 0.0
  %1502 = vmatprep.subr.mxu0 0.0
  %1503 = vmatpush2.msra.mxu0 0.0
  %1504 = vmatprep.subr.mxu0 0.0
  %1505 = vmatpush2.msra.mxu0 0.0
  %1506 = vmatprep.subr.mxu0 0.0
  %1507 = vmatpush2.msra.mxu0 0.0
  %1508 = vmatprep.subr.mxu0 0.0
  %1509 = vmatpush2.msra.mxu0 0.0
  %1510 = vmatprep.subr.mxu0 0.0
  %1511 = vmatpush2.msra.mxu0 0.0
  %1512 = vmatprep.subr.mxu0 0.0
  %1513 = vmatpush2.msra.mxu0 0.0
  %1514 = vmatprep.subr.mxu0 0.0
  %1515 = vmatpush2.msra.mxu0 0.0
  %1516 = vmatprep.subr.mxu0 0.0
  %1517 = vmatpush2.msra.mxu0 0.0
  %1518 = vmatprep.mubr.f32.mxu0 0.0
  %1519 = vmatmul.mubr.f32.gmra.mxu0 %v1452
  %v1520 = vpop.f32.mrf.mxu0
  %v1521 = vadd.f32 0.0, %v1520
  %v1522 = vpop.f32.mrf.mxu0
  %1523 = vdwg.mxu0
  %v1524 = vlaneseq
  %v1525 = vshrl.u32 %v1524, 7
  %v1526 = vsub.s32 3, %v1525
  %v1527 = vrot.slane %v224, %v1526
  %v1528 = vadd.f32 %v1527, %v1521
  %v1529 = vxor.u32 %v1528, 2147483648
  %v1530 = vmul.f32 %v1529, 1.442695
  %v1531 = vpow.pop %v1530
  %v1532 = vadd.f32 %v1531, 1.0
  %v1533 = vrcp.pop %v1532
  %v1534 = vmul.f32 1.0, %v1533
  %v1535 = vtanh.pop %v1528
  %v1536 = vmul.f32 %v1534, %v1442
  %1538 = vrot.lane.b32.xlu0 %v1535, 32
  %v1539 = vpop.permute.xlu0 %1538
  %v1541 = vmul.f32 %v1534, %v1539
  %1543 = vrot.lane.b32.xlu0 %v1541, 32
  %v1544 = vpop.permute.xlu0 %1543
  %v1546 = vadd.f32 %v1536, %v1544
  %v1547 = vtanh.pop %v1546
  %1549 = vrot.lane.b32.xlu0 %v1547, 32
  %v1550 = vpop.permute.xlu0 %1549
  %v1552 = vmul.f32 %v1534, %v1550
  %1554 = vrot.lane.b32.xlu0 %v1552, 64
  %v1555 = vpop.permute.xlu0 %1554
  %v1556 = vsel %vm228, %v1555, 0
  %1558 = vmatprep.subr.mxu0 0.0
  %1559 = vmatpush1.msra.mxu0 0.0
  %1560 = vmatprep.subr.mxu0 0.0
  %1561 = vmatpush1.msra.mxu0 0.0
  %1562 = vmatprep.subr.mxu0 0.0
  %1563 = vmatpush1.msra.mxu0 0.0
  %1564 = vmatprep.subr.mxu0 0.0
  %1565 = vmatpush1.msra.mxu0 0.0
  %1566 = vmatprep.subr.mxu0 0.0
  %1567 = vmatpush1.msra.mxu0 0.0
  %1568 = vmatprep.subr.mxu0 0.0
  %1569 = vmatpush1.msra.mxu0 0.0
  %1570 = vmatprep.subr.mxu0 0.0
  %1571 = vmatpush1.msra.mxu0 0.0
  %1572 = vmatprep.subr.mxu0 0.0
  %1573 = vmatpush1.msra.mxu0 0.0
  %1574 = vmatprep.subr.mxu0 0.0
  %1575 = vmatpush1.msra.mxu0 0.0
  %1576 = vmatprep.subr.mxu0 0.0
  %1577 = vmatpush1.msra.mxu0 0.0
  %1578 = vmatprep.subr.mxu0 0.0
  %1579 = vmatpush1.msra.mxu0 0.0
  %1580 = vmatprep.subr.mxu0 0.0
  %1581 = vmatpush1.msra.mxu0 0.0
  %1582 = vmatprep.subr.mxu0 0.0
  %1583 = vmatpush1.msra.mxu0 %v134
  %1584 = vmatprep.subr.mxu0 0.0
  %1585 = vmatpush1.msra.mxu0 %v133
  %1586 = vmatprep.subr.mxu0 0.0
  %1587 = vmatpush1.msra.mxu0 %v132
  %1588 = vmatprep.subr.mxu0 0.0
  %1589 = vmatpush1.msra.mxu0 %v131
  %1590 = vmatprep.subr.mxu0 0.0
  %1591 = vmatpush2.msra.mxu0 0.0
  %1592 = vmatprep.subr.mxu0 0.0
  %1593 = vmatpush2.msra.mxu0 0.0
  %1594 = vmatprep.subr.mxu0 0.0
  %1595 = vmatpush2.msra.mxu0 0.0
  %1596 = vmatprep.subr.mxu0 0.0
  %1597 = vmatpush2.msra.mxu0 0.0
  %1598 = vmatprep.subr.mxu0 0.0
  %1599 = vmatpush2.msra.mxu0 0.0
  %1600 = vmatprep.subr.mxu0 0.0
  %1601 = vmatpush2.msra.mxu0 0.0
  %1602 = vmatprep.subr.mxu0 0.0
  %1603 = vmatpush2.msra.mxu0 0.0
  %1604 = vmatprep.subr.mxu0 0.0
  %1605 = vmatpush2.msra.mxu0 0.0
  %1606 = vmatprep.subr.mxu0 0.0
  %1607 = vmatpush2.msra.mxu0 0.0
  %1608 = vmatprep.subr.mxu0 0.0
  %1609 = vmatpush2.msra.mxu0 0.0
  %1610 = vmatprep.subr.mxu0 0.0
  %1611 = vmatpush2.msra.mxu0 0.0
  %1612 = vmatprep.subr.mxu0 0.0
  %1613 = vmatpush2.msra.mxu0 0.0
  %1614 = vmatprep.subr.mxu0 0.0
  %1615 = vmatpush2.msra.mxu0 0.0
  %1616 = vmatprep.subr.mxu0 0.0
  %1617 = vmatpush2.msra.mxu0 0.0
  %1618 = vmatprep.subr.mxu0 0.0
  %1619 = vmatpush2.msra.mxu0 0.0
  %1620 = vmatprep.subr.mxu0 0.0
  %1621 = vmatpush2.msra.mxu0 0.0
  %1622 = vmatprep.mubr.f32.mxu0 0.0
  %1623 = vmatmul.mubr.f32.gmra.mxu0 %v1556
  %v1624 = vpop.f32.mrf.mxu0
  %v1625 = vadd.f32 0.0, %v1624
  %v1626 = vpop.f32.mrf.mxu0
  %1627 = vdwg.mxu0
  %v1628 = vlaneseq
  %v1629 = vshrl.u32 %v1628, 7
  %v1630 = vsub.s32 4, %v1629
  %v1631 = vrot.slane %v224, %v1630
  %v1632 = vadd.f32 %v1631, %v1625
  %v1633 = vxor.u32 %v1632, 2147483648
  %v1634 = vmul.f32 %v1633, 1.442695
  %v1635 = vpow.pop %v1634
  %v1636 = vadd.f32 %v1635, 1.0
  %v1637 = vrcp.pop %v1636
  %v1638 = vmul.f32 1.0, %v1637
  %v1639 = vtanh.pop %v1632
  %v1640 = vmul.f32 %v1638, %v1546
  %1642 = vrot.lane.b32.xlu0 %v1639, 32
  %v1643 = vpop.permute.xlu0 %1642
  %v1645 = vmul.f32 %v1638, %v1643
  %1647 = vrot.lane.b32.xlu0 %v1645, 32
  %v1648 = vpop.permute.xlu0 %1647
  %v1650 = vadd.f32 %v1640, %v1648
  %v1651 = vtanh.pop %v1650
  %1653 = vrot.lane.b32.xlu0 %v1651, 32
  %v1654 = vpop.permute.xlu0 %1653
  %v1656 = vmul.f32 %v1638, %v1654
  %1658 = vrot.lane.b32.xlu0 %v1656, 64
  %v1659 = vpop.permute.xlu0 %1658
  %v1660 = vsel %vm228, %v1659, 0
  %1662 = vmatprep.subr.mxu0 0.0
  %1663 = vmatpush1.msra.mxu0 0.0
  %1664 = vmatprep.subr.mxu0 0.0
  %1665 = vmatpush1.msra.mxu0 0.0
  %1666 = vmatprep.subr.mxu0 0.0
  %1667 = vmatpush1.msra.mxu0 0.0
  %1668 = vmatprep.subr.mxu0 0.0
  %1669 = vmatpush1.msra.mxu0 0.0
  %1670 = vmatprep.subr.mxu0 0.0
  %1671 = vmatpush1.msra.mxu0 0.0
  %1672 = vmatprep.subr.mxu0 0.0
  %1673 = vmatpush1.msra.mxu0 0.0
  %1674 = vmatprep.subr.mxu0 0.0
  %1675 = vmatpush1.msra.mxu0 0.0
  %1676 = vmatprep.subr.mxu0 0.0
  %1677 = vmatpush1.msra.mxu0 0.0
  %1678 = vmatprep.subr.mxu0 0.0
  %1679 = vmatpush1.msra.mxu0 0.0
  %1680 = vmatprep.subr.mxu0 0.0
  %1681 = vmatpush1.msra.mxu0 0.0
  %1682 = vmatprep.subr.mxu0 0.0
  %1683 = vmatpush1.msra.mxu0 0.0
  %1684 = vmatprep.subr.mxu0 0.0
  %1685 = vmatpush1.msra.mxu0 0.0
  %1686 = vmatprep.subr.mxu0 0.0
  %1687 = vmatpush1.msra.mxu0 %v134
  %1688 = vmatprep.subr.mxu0 0.0
  %1689 = vmatpush1.msra.mxu0 %v133
  %1690 = vmatprep.subr.mxu0 0.0
  %1691 = vmatpush1.msra.mxu0 %v132
  %1692 = vmatprep.subr.mxu0 0.0
  %1693 = vmatpush1.msra.mxu0 %v131
  %1694 = vmatprep.subr.mxu0 0.0
  %1695 = vmatpush2.msra.mxu0 0.0
  %1696 = vmatprep.subr.mxu0 0.0
  %1697 = vmatpush2.msra.mxu0 0.0
  %1698 = vmatprep.subr.mxu0 0.0
  %1699 = vmatpush2.msra.mxu0 0.0
  %1700 = vmatprep.subr.mxu0 0.0
  %1701 = vmatpush2.msra.mxu0 0.0
  %1702 = vmatprep.subr.mxu0 0.0
  %1703 = vmatpush2.msra.mxu0 0.0
  %1704 = vmatprep.subr.mxu0 0.0
  %1705 = vmatpush2.msra.mxu0 0.0
  %1706 = vmatprep.subr.mxu0 0.0
  %1707 = vmatpush2.msra.mxu0 0.0
  %1708 = vmatprep.subr.mxu0 0.0
  %1709 = vmatpush2.msra.mxu0 0.0
  %1710 = vmatprep.subr.mxu0 0.0
  %1711 = vmatpush2.msra.mxu0 0.0
  %1712 = vmatprep.subr.mxu0 0.0
  %1713 = vmatpush2.msra.mxu0 0.0
  %1714 = vmatprep.subr.mxu0 0.0
  %1715 = vmatpush2.msra.mxu0 0.0
  %1716 = vmatprep.subr.mxu0 0.0
  %1717 = vmatpush2.msra.mxu0 0.0
  %1718 = vmatprep.subr.mxu0 0.0
  %1719 = vmatpush2.msra.mxu0 0.0
  %1720 = vmatprep.subr.mxu0 0.0
  %1721 = vmatpush2.msra.mxu0 0.0
  %1722 = vmatprep.subr.mxu0 0.0
  %1723 = vmatpush2.msra.mxu0 0.0
  %1724 = vmatprep.subr.mxu0 0.0
  %1725 = vmatpush2.msra.mxu0 0.0
  %1726 = vmatprep.mubr.f32.mxu0 0.0
  %1727 = vmatmul.mubr.f32.gmra.mxu0 %v1660
  %v1728 = vpop.f32.mrf.mxu0
  %v1729 = vadd.f32 0.0, %v1728
  %v1730 = vpop.f32.mrf.mxu0
  %1731 = vdwg.mxu0
  %v1732 = vlaneseq
  %v1733 = vshrl.u32 %v1732, 7
  %v1734 = vsub.s32 5, %v1733
  %v1735 = vrot.slane %v224, %v1734
  %v1736 = vadd.f32 %v1735, %v1729
  %v1737 = vxor.u32 %v1736, 2147483648
  %v1738 = vmul.f32 %v1737, 1.442695
  %v1739 = vpow.pop %v1738
  %v1740 = vadd.f32 %v1739, 1.0
  %v1741 = vrcp.pop %v1740
  %v1742 = vmul.f32 1.0, %v1741
  %v1743 = vtanh.pop %v1736
  %v1744 = vmul.f32 %v1742, %v1650
  %1746 = vrot.lane.b32.xlu0 %v1743, 32
  %v1747 = vpop.permute.xlu0 %1746
  %v1749 = vmul.f32 %v1742, %v1747
  %1751 = vrot.lane.b32.xlu0 %v1749, 32
  %v1752 = vpop.permute.xlu0 %1751
  %v1754 = vadd.f32 %v1744, %v1752
  %v1755 = vtanh.pop %v1754
  %1757 = vrot.lane.b32.xlu0 %v1755, 32
  %v1758 = vpop.permute.xlu0 %1757
  %v1760 = vmul.f32 %v1742, %v1758
  %1762 = vrot.lane.b32.xlu0 %v1760, 64
  %v1763 = vpop.permute.xlu0 %1762
  %v1764 = vsel %vm228, %v1763, 0
  %1766 = vmatprep.subr.mxu0 0.0
  %1767 = vmatpush1.msra.mxu0 0.0
  %1768 = vmatprep.subr.mxu0 0.0
  %1769 = vmatpush1.msra.mxu0 0.0
  %1770 = vmatprep.subr.mxu0 0.0
  %1771 = vmatpush1.msra.mxu0 0.0
  %1772 = vmatprep.subr.mxu0 0.0
  %1773 = vmatpush1.msra.mxu0 0.0
  %1774 = vmatprep.subr.mxu0 0.0
  %1775 = vmatpush1.msra.mxu0 0.0
  %1776 = vmatprep.subr.mxu0 0.0
  %1777 = vmatpush1.msra.mxu0 0.0
  %1778 = vmatprep.subr.mxu0 0.0
  %1779 = vmatpush1.msra.mxu0 0.0
  %1780 = vmatprep.subr.mxu0 0.0
  %1781 = vmatpush1.msra.mxu0 0.0
  %1782 = vmatprep.subr.mxu0 0.0
  %1783 = vmatpush1.msra.mxu0 0.0
  %1784 = vmatprep.subr.mxu0 0.0
  %1785 = vmatpush1.msra.mxu0 0.0
  %1786 = vmatprep.subr.mxu0 0.0
  %1787 = vmatpush1.msra.mxu0 0.0
  %1788 = vmatprep.subr.mxu0 0.0
  %1789 = vmatpush1.msra.mxu0 0.0
  %1790 = vmatprep.subr.mxu0 0.0
  %1791 = vmatpush1.msra.mxu0 %v134
  %1792 = vmatprep.subr.mxu0 0.0
  %1793 = vmatpush1.msra.mxu0 %v133
  %1794 = vmatprep.subr.mxu0 0.0
  %1795 = vmatpush1.msra.mxu0 %v132
  %1796 = vmatprep.subr.mxu0 0.0
  %1797 = vmatpush1.msra.mxu0 %v131
  %1798 = vmatprep.subr.mxu0 0.0
  %1799 = vmatpush2.msra.mxu0 0.0
  %1800 = vmatprep.subr.mxu0 0.0
  %1801 = vmatpush2.msra.mxu0 0.0
  %1802 = vmatprep.subr.mxu0 0.0
  %1803 = vmatpush2.msra.mxu0 0.0
  %1804 = vmatprep.subr.mxu0 0.0
  %1805 = vmatpush2.msra.mxu0 0.0
  %1806 = vmatprep.subr.mxu0 0.0
  %1807 = vmatpush2.msra.mxu0 0.0
  %1808 = vmatprep.subr.mxu0 0.0
  %1809 = vmatpush2.msra.mxu0 0.0
  %1810 = vmatprep.subr.mxu0 0.0
  %1811 = vmatpush2.msra.mxu0 0.0
  %1812 = vmatprep.subr.mxu0 0.0
  %1813 = vmatpush2.msra.mxu0 0.0
  %1814 = vmatprep.subr.mxu0 0.0
  %1815 = vmatpush2.msra.mxu0 0.0
  %1816 = vmatprep.subr.mxu0 0.0
  %1817 = vmatpush2.msra.mxu0 0.0
  %1818 = vmatprep.subr.mxu0 0.0
  %1819 = vmatpush2.msra.mxu0 0.0
  %1820 = vmatprep.subr.mxu0 0.0
  %1821 = vmatpush2.msra.mxu0 0.0
  %1822 = vmatprep.subr.mxu0 0.0
  %1823 = vmatpush2.msra.mxu0 0.0
  %1824 = vmatprep.subr.mxu0 0.0
  %1825 = vmatpush2.msra.mxu0 0.0
  %1826 = vmatprep.subr.mxu0 0.0
  %1827 = vmatpush2.msra.mxu0 0.0
  %1828 = vmatprep.subr.mxu0 0.0
  %1829 = vmatpush2.msra.mxu0 0.0
  %1830 = vmatprep.mubr.f32.mxu0 0.0
  %1831 = vmatmul.mubr.f32.gmra.mxu0 %v1764
  %v1832 = vpop.f32.mrf.mxu0
  %v1833 = vadd.f32 0.0, %v1832
  %v1834 = vpop.f32.mrf.mxu0
  %1835 = vdwg.mxu0
  %v1836 = vlaneseq
  %v1837 = vshrl.u32 %v1836, 7
  %v1838 = vsub.s32 6, %v1837
  %v1839 = vrot.slane %v224, %v1838
  %v1840 = vadd.f32 %v1839, %v1833
  %v1841 = vxor.u32 %v1840, 2147483648
  %v1842 = vmul.f32 %v1841, 1.442695
  %v1843 = vpow.pop %v1842
  %v1844 = vadd.f32 %v1843, 1.0
  %v1845 = vrcp.pop %v1844
  %v1846 = vmul.f32 1.0, %v1845
  %v1847 = vtanh.pop %v1840
  %v1848 = vmul.f32 %v1846, %v1754
  %1850 = vrot.lane.b32.xlu0 %v1847, 32
  %v1851 = vpop.permute.xlu0 %1850
  %v1853 = vmul.f32 %v1846, %v1851
  %1855 = vrot.lane.b32.xlu0 %v1853, 32
  %v1856 = vpop.permute.xlu0 %1855
  %v1858 = vadd.f32 %v1848, %v1856
  %v1859 = vtanh.pop %v1858
  %1861 = vrot.lane.b32.xlu0 %v1859, 32
  %v1862 = vpop.permute.xlu0 %1861
  %v1864 = vmul.f32 %v1846, %v1862
  %1866 = vrot.lane.b32.xlu0 %v1864, 64
  %v1867 = vpop.permute.xlu0 %1866
  %v1868 = vsel %vm228, %v1867, 0
  %1870 = vmatprep.subr.mxu0 0.0
  %1871 = vmatpush1.msra.mxu0 0.0
  %1872 = vmatprep.subr.mxu0 0.0
  %1873 = vmatpush1.msra.mxu0 0.0
  %1874 = vmatprep.subr.mxu0 0.0
  %1875 = vmatpush1.msra.mxu0 0.0
  %1876 = vmatprep.subr.mxu0 0.0
  %1877 = vmatpush1.msra.mxu0 0.0
  %1878 = vmatprep.subr.mxu0 0.0
  %1879 = vmatpush1.msra.mxu0 0.0
  %1880 = vmatprep.subr.mxu0 0.0
  %1881 = vmatpush1.msra.mxu0 0.0
  %1882 = vmatprep.subr.mxu0 0.0
  %1883 = vmatpush1.msra.mxu0 0.0
  %1884 = vmatprep.subr.mxu0 0.0
  %1885 = vmatpush1.msra.mxu0 0.0
  %1886 = vmatprep.subr.mxu0 0.0
  %1887 = vmatpush1.msra.mxu0 0.0
  %1888 = vmatprep.subr.mxu0 0.0
  %1889 = vmatpush1.msra.mxu0 0.0
  %1890 = vmatprep.subr.mxu0 0.0
  %1891 = vmatpush1.msra.mxu0 0.0
  %1892 = vmatprep.subr.mxu0 0.0
  %1893 = vmatpush1.msra.mxu0 0.0
  %1894 = vmatprep.subr.mxu0 0.0
  %1895 = vmatpush1.msra.mxu0 %v134
  %1896 = vmatprep.subr.mxu0 0.0
  %1897 = vmatpush1.msra.mxu0 %v133
  %1898 = vmatprep.subr.mxu0 0.0
  %1899 = vmatpush1.msra.mxu0 %v132
  %1900 = vmatprep.subr.mxu0 0.0
  %1901 = vmatpush1.msra.mxu0 %v131
  %1902 = vmatprep.subr.mxu0 0.0
  %1903 = vmatpush2.msra.mxu0 0.0
  %1904 = vmatprep.subr.mxu0 0.0
  %1905 = vmatpush2.msra.mxu0 0.0
  %1906 = vmatprep.subr.mxu0 0.0
  %1907 = vmatpush2.msra.mxu0 0.0
  %1908 = vmatprep.subr.mxu0 0.0
  %1909 = vmatpush2.msra.mxu0 0.0
  %1910 = vmatprep.subr.mxu0 0.0
  %1911 = vmatpush2.msra.mxu0 0.0
  %1912 = vmatprep.subr.mxu0 0.0
  %1913 = vmatpush2.msra.mxu0 0.0
  %1914 = vmatprep.subr.mxu0 0.0
  %1915 = vmatpush2.msra.mxu0 0.0
  %1916 = vmatprep.subr.mxu0 0.0
  %1917 = vmatpush2.msra.mxu0 0.0
  %1918 = vmatprep.subr.mxu0 0.0
  %1919 = vmatpush2.msra.mxu0 0.0
  %1920 = vmatprep.subr.mxu0 0.0
  %1921 = vmatpush2.msra.mxu0 0.0
  %1922 = vmatprep.subr.mxu0 0.0
  %1923 = vmatpush2.msra.mxu0 0.0
  %1924 = vmatprep.subr.mxu0 0.0
  %1925 = vmatpush2.msra.mxu0 0.0
  %1926 = vmatprep.subr.mxu0 0.0
  %1927 = vmatpush2.msra.mxu0 0.0
  %1928 = vmatprep.subr.mxu0 0.0
  %1929 = vmatpush2.msra.mxu0 0.0
  %1930 = vmatprep.subr.mxu0 0.0
  %1931 = vmatpush2.msra.mxu0 0.0
  %1932 = vmatprep.subr.mxu0 0.0
  %1933 = vmatpush2.msra.mxu0 0.0
  %1934 = vmatprep.mubr.f32.mxu0 0.0
  %1935 = vmatmul.mubr.f32.gmra.mxu0 %v1868
  %v1936 = vpop.f32.mrf.mxu0
  %v1937 = vadd.f32 0.0, %v1936
  %v1938 = vpop.f32.mrf.mxu0
  %1939 = vdwg.mxu0
  %v1940 = vlaneseq
  %v1941 = vshrl.u32 %v1940, 7
  %v1942 = vsub.s32 7, %v1941
  %v1943 = vrot.slane %v224, %v1942
  %v1944 = vadd.f32 %v1943, %v1937
  %v1945 = vxor.u32 %v1944, 2147483648
  %v1946 = vmul.f32 %v1945, 1.442695
  %v1947 = vpow.pop %v1946
  %v1948 = vadd.f32 %v1947, 1.0
  %v1949 = vrcp.pop %v1948
  %v1950 = vmul.f32 1.0, %v1949
  %v1951 = vtanh.pop %v1944
  %v1952 = vmul.f32 %v1950, %v1858
  %1954 = vrot.lane.b32.xlu0 %v1951, 32
  %v1955 = vpop.permute.xlu0 %1954
  %v1957 = vmul.f32 %v1950, %v1955
  %1959 = vrot.lane.b32.xlu0 %v1957, 32
  %v1960 = vpop.permute.xlu0 %1959
  %v1962 = vadd.f32 %v1952, %v1960
  %v1963 = vtanh.pop %v1962
  %1965 = vrot.lane.b32.xlu0 %v1963, 32
  %v1966 = vpop.permute.xlu0 %1965
  %v1968 = vmul.f32 %v1950, %v1966
  %1970 = vrot.lane.b32.xlu0 %v1968, 64
  %v1971 = vpop.permute.xlu0 %1970
  %v1972 = vsel %vm228, %v1971, 0
  %1974 = vmatprep.subr.mxu0 0.0
  %1975 = vmatpush1.msra.mxu0 0.0
  %1976 = vmatprep.subr.mxu0 0.0
  %1977 = vmatpush1.msra.mxu0 0.0
  %1978 = vmatprep.subr.mxu0 0.0
  %1979 = vmatpush1.msra.mxu0 0.0
  %1980 = vmatprep.subr.mxu0 0.0
  %1981 = vmatpush1.msra.mxu0 0.0
  %1982 = vmatprep.subr.mxu0 0.0
  %1983 = vmatpush1.msra.mxu0 0.0
  %1984 = vmatprep.subr.mxu0 0.0
  %1985 = vmatpush1.msra.mxu0 0.0
  %1986 = vmatprep.subr.mxu0 0.0
  %1987 = vmatpush1.msra.mxu0 0.0
  %1988 = vmatprep.subr.mxu0 0.0
  %1989 = vmatpush1.msra.mxu0 0.0
  %1990 = vmatprep.subr.mxu0 0.0
  %1991 = vmatpush1.msra.mxu0 0.0
  %1992 = vmatprep.subr.mxu0 0.0
  %1993 = vmatpush1.msra.mxu0 0.0
  %1994 = vmatprep.subr.mxu0 0.0
  %1995 = vmatpush1.msra.mxu0 0.0
  %1996 = vmatprep.subr.mxu0 0.0
  %1997 = vmatpush1.msra.mxu0 0.0
  %1998 = vmatprep.subr.mxu0 0.0
  %1999 = vmatpush1.msra.mxu0 %v139
  %2000 = vmatprep.subr.mxu0 0.0
  %2001 = vmatpush1.msra.mxu0 %v138
  %2002 = vmatprep.subr.mxu0 0.0
  %2003 = vmatpush1.msra.mxu0 %v137
  %2004 = vmatprep.subr.mxu0 0.0
  %2005 = vmatpush1.msra.mxu0 %v136
  %2006 = vmatprep.subr.mxu0 0.0
  %2007 = vmatpush2.msra.mxu0 0.0
  %2008 = vmatprep.subr.mxu0 0.0
  %2009 = vmatpush2.msra.mxu0 0.0
  %2010 = vmatprep.subr.mxu0 0.0
  %2011 = vmatpush2.msra.mxu0 0.0
  %2012 = vmatprep.subr.mxu0 0.0
  %2013 = vmatpush2.msra.mxu0 0.0
  %2014 = vmatprep.subr.mxu0 0.0
  %2015 = vmatpush2.msra.mxu0 0.0
  %2016 = vmatprep.subr.mxu0 0.0
  %2017 = vmatpush2.msra.mxu0 0.0
  %2018 = vmatprep.subr.mxu0 0.0
  %2019 = vmatpush2.msra.mxu0 0.0
  %2020 = vmatprep.subr.mxu0 0.0
  %2021 = vmatpush2.msra.mxu0 0.0
  %2022 = vmatprep.subr.mxu0 0.0
  %2023 = vmatpush2.msra.mxu0 0.0
  %2024 = vmatprep.subr.mxu0 0.0
  %2025 = vmatpush2.msra.mxu0 0.0
  %2026 = vmatprep.subr.mxu0 0.0
  %2027 = vmatpush2.msra.mxu0 0.0
  %2028 = vmatprep.subr.mxu0 0.0
  %2029 = vmatpush2.msra.mxu0 0.0
  %2030 = vmatprep.subr.mxu0 0.0
  %2031 = vmatpush2.msra.mxu0 0.0
  %2032 = vmatprep.subr.mxu0 0.0
  %2033 = vmatpush2.msra.mxu0 0.0
  %2034 = vmatprep.subr.mxu0 0.0
  %2035 = vmatpush2.msra.mxu0 0.0
  %2036 = vmatprep.subr.mxu0 0.0
  %2037 = vmatpush2.msra.mxu0 0.0
  %2038 = vmatprep.mubr.f32.mxu0 0.0
  %2039 = vmatmul.mubr.f32.gmra.mxu0 %v1972
  %v2040 = vpop.f32.mrf.mxu0
  %v2041 = vadd.f32 %v1066, %v2040
  %v2042 = vpop.f32.mrf.mxu0
  %2043 = vdwg.mxu0
  %v2045 = vrot.slane %v2041, 6
  %v2047 = vsel %vm50, %v1139, %v2045
  %2052 = vrot.lane.b32.xlu0 %v136, 96
  %v2053 = vpop.permute.xlu0 %2052
  %2054 = vrot.lane.b32.xlu0 %v137, 96
  %v2055 = vpop.permute.xlu0 %2054
  %2056 = vrot.lane.b32.xlu0 %v138, 96
  %v2057 = vpop.permute.xlu0 %2056
  %2058 = vrot.lane.b32.xlu0 %v139, 96
  %v2059 = vpop.permute.xlu0 %2058
  %2065 = vrot.lane.b32.xlu0 %v1066, 96
  %v2066 = vpop.permute.xlu0 %2065
  %v2069 = vsel %vm228, %v2047, 0
  %2071 = vmatprep.subr.mxu0 0.0
  %2072 = vmatpush1.msra.mxu0 0.0
  %2073 = vmatprep.subr.mxu0 0.0
  %2074 = vmatpush1.msra.mxu0 0.0
  %2075 = vmatprep.subr.mxu0 0.0
  %2076 = vmatpush1.msra.mxu0 0.0
  %2077 = vmatprep.subr.mxu0 0.0
  %2078 = vmatpush1.msra.mxu0 0.0
  %2079 = vmatprep.subr.mxu0 0.0
  %2080 = vmatpush1.msra.mxu0 0.0
  %2081 = vmatprep.subr.mxu0 0.0
  %2082 = vmatpush1.msra.mxu0 0.0
  %2083 = vmatprep.subr.mxu0 0.0
  %2084 = vmatpush1.msra.mxu0 0.0
  %2085 = vmatprep.subr.mxu0 0.0
  %2086 = vmatpush1.msra.mxu0 0.0
  %2087 = vmatprep.subr.mxu0 0.0
  %2088 = vmatpush1.msra.mxu0 0.0
  %2089 = vmatprep.subr.mxu0 0.0
  %2090 = vmatpush1.msra.mxu0 0.0
  %2091 = vmatprep.subr.mxu0 0.0
  %2092 = vmatpush1.msra.mxu0 0.0
  %2093 = vmatprep.subr.mxu0 0.0
  %2094 = vmatpush1.msra.mxu0 0.0
  %2095 = vmatprep.subr.mxu0 0.0
  %2096 = vmatpush1.msra.mxu0 %v2059
  %2097 = vmatprep.subr.mxu0 0.0
  %2098 = vmatpush1.msra.mxu0 %v2057
  %2099 = vmatprep.subr.mxu0 0.0
  %2100 = vmatpush1.msra.mxu0 %v2055
  %2101 = vmatprep.subr.mxu0 0.0
  %2102 = vmatpush1.msra.mxu0 %v2053
  %2103 = vmatprep.subr.mxu0 0.0
  %2104 = vmatpush2.msra.mxu0 0.0
  %2105 = vmatprep.subr.mxu0 0.0
  %2106 = vmatpush2.msra.mxu0 0.0
  %2107 = vmatprep.subr.mxu0 0.0
  %2108 = vmatpush2.msra.mxu0 0.0
  %2109 = vmatprep.subr.mxu0 0.0
  %2110 = vmatpush2.msra.mxu0 0.0
  %2111 = vmatprep.subr.mxu0 0.0
  %2112 = vmatpush2.msra.mxu0 0.0
  %2113 = vmatprep.subr.mxu0 0.0
  %2114 = vmatpush2.msra.mxu0 0.0
  %2115 = vmatprep.subr.mxu0 0.0
  %2116 = vmatpush2.msra.mxu0 0.0
  %2117 = vmatprep.subr.mxu0 0.0
  %2118 = vmatpush2.msra.mxu0 0.0
  %2119 = vmatprep.subr.mxu0 0.0
  %2120 = vmatpush2.msra.mxu0 0.0
  %2121 = vmatprep.subr.mxu0 0.0
  %2122 = vmatpush2.msra.mxu0 0.0
  %2123 = vmatprep.subr.mxu0 0.0
  %2124 = vmatpush2.msra.mxu0 0.0
  %2125 = vmatprep.subr.mxu0 0.0
  %2126 = vmatpush2.msra.mxu0 0.0
  %2127 = vmatprep.subr.mxu0 0.0
  %2128 = vmatpush2.msra.mxu0 0.0
  %2129 = vmatprep.subr.mxu0 0.0
  %2130 = vmatpush2.msra.mxu0 0.0
  %2131 = vmatprep.subr.mxu0 0.0
  %2132 = vmatpush2.msra.mxu0 0.0
  %2133 = vmatprep.subr.mxu0 0.0
  %2134 = vmatpush2.msra.mxu0 0.0
  %2135 = vmatprep.mubr.f32.mxu0 0.0
  %2136 = vmatmul.mubr.f32.gmra.mxu0 %v2069
  %v2137 = vpop.f32.mrf.mxu0
  %v2138 = vadd.f32 %v2066, %v2137
  %v2139 = vpop.f32.mrf.mxu0
  %2140 = vdwg.mxu0
  %v2141 = vrot.slane %v1968, 4
  %2142 = vrot.lane.b32.xlu0 %v2141, 64
  %v2143 = vpop.permute.xlu0 %2142
  %v2146 = vrot.slane %v1962, 2
  %2147 = vrot.lane.b32.xlu0 %v2146, 96
  %v2148 = vpop.permute.xlu0 %2147
  %vm2150 = vcmask 1043456
  %v2151 = vsel %vm2150, %v2047, %v2143
  %vm2152 = vcmask 1045504
  %v2153 = vsel %vm2152, %v2151, %v2148
  %vm2154 = vcmask 39936
  %v2155 = vsel %vm2154, %v2138, 0.0
  %v2156 = vsel %vm2150, %v2155, 0.0
  %2158 = vrot.lane.b32.xlu0 %v2156, 32
  %v2159 = vpop.permute.xlu0 %2158
  %v2161 = vsel %vm228, %v2153, %v2159
  %2162 = vst [vmem:[%s5] sm:$0xff] %v2161
  // Predicated region
  $region22: #{sentiment_rnn_forward.1} parent=0 // pred_check
    _
  $region23: #{sentiment_rnn_forward.1} parent=0 // pred_check_branch
    %2164 = sbr.rel (0) target = $region25
  $region24: #{sentiment_rnn_forward.1} parent=0 // pred_region
    _
  $region25: #{sentiment_rnn_forward.1} parent=0 // pred_fallthru
    _
  // Predicated region
  $region26: #{sentiment_rnn_forward.1} parent=0 // pred_check
    _
  $region27: #{sentiment_rnn_forward.1} parent=0 // pred_check_branch
    %2166 = sbr.rel (0) target = $region29
  $region28: #{sentiment_rnn_forward.1} parent=0 // pred_region
    _
  $region29: #{sentiment_rnn_forward.1} parent=0 // pred_fallthru
    _

</llo_original>
